<compile_context>
chip_gen: v7x
topology: tpu7x:2x2x1
jax: 0.10.0
libtpu: 0.0.40
codegen_flags: <defaults>
</compile_context>

<pallas_src>
import functools

import jax
import jax.numpy as jnp
from jax import lax
from jax.experimental import pallas as pl
from jax.experimental.pallas import tpu as pltpu


def _round_up(n, m):
    return ((n + m - 1) // m) * m


# ----------------------------------------------------------------------------
# One-time parameter packing: 2 slabs (weights, biases) -> 2 entry DMAs.
# Weight slot layout (each slot (slot_r, slot_c), matrix at top-left, rest 0):
#   0: se_w1 (x_dim, H)      1: se_w2 (H, H)
#   2: wih   (d_in, 3H)      3: whh   (H, 3H)          gate order r|z|n
#   4: hw1   (H, 48)  = [mu_w1 | sg_w1]
#   5: hw2   (48, 32) = blockdiag(mu_w2 (32,16), sg_w2 (16,16))
#   6: hw3   (32, H+1)= blockdiag(mu_w3 (16,H),  sg_w3 (16,1))
# Bias rows (each a row of an (8, slot_c) slab):
#   0: se_b1   1: se_b2   2: [bih_r+bhh_r | bih_z+bhh_z | bih_n]   3: bhh_n
#   4: hb1=[mu_b1|sg_b1]  5: hb2=[mu_b2|sg_b2]  6: hb3=[mu_b3|sg_b3]  7: zero
# ----------------------------------------------------------------------------
def pack_params(p, h_dim):
    f32 = jnp.float32
    H = h_dim

    wih = jnp.concatenate([p["gru_wih_r"], p["gru_wih_z"], p["gru_wih_n"]], axis=1)
    whh = jnp.concatenate([p["gru_whh_r"], p["gru_whh_z"], p["gru_whh_n"]], axis=1)
    hw1 = jnp.concatenate([p["mu_w1"], p["sg_w1"]], axis=1)                     # (H, 48)
    hw2 = (jnp.zeros((48, 32), f32)
           .at[:32, :16].set(p["mu_w2"]).at[32:, 16:].set(p["sg_w2"]))
    hw3 = (jnp.zeros((32, H + 1), f32)
           .at[:16, :H].set(p["mu_w3"]).at[16:, H:].set(p["sg_w3"]))
    mats = [p["se_w1"], p["se_w2"], wih, whh, hw1, hw2, hw3]

    slot_r = _round_up(max(m.shape[0] for m in mats), 8)
    slot_c = _round_up(max(m.shape[1] for m in mats), 128)

    def put(m):
        return (jnp.zeros((slot_r, slot_c), f32)
                .at[:m.shape[0], :m.shape[1]].set(m.astype(f32)))

    w_pack = jnp.stack([put(m) for m in mats], axis=0)                          # (7, R, C)

    bi_fold = jnp.concatenate([p["gru_bih_r"] + p["gru_bhh_r"],
                               p["gru_bih_z"] + p["gru_bhh_z"],
                               p["gru_bih_n"]], axis=1)                          # (1, 3H)
    hb1 = jnp.concatenate([p["mu_b1"], p["sg_b1"]], axis=1)
    hb2 = jnp.concatenate([p["mu_b2"], p["sg_b2"]], axis=1)
    hb3 = jnp.concatenate([p["mu_b3"], p["sg_b3"]], axis=1)
    rows = [p["se_b1"], p["se_b2"], bi_fold, p["gru_bhh_n"], hb1, hb2, hb3]

    def brow(v):
        return jnp.zeros((1, slot_c), f32).at[:, :v.shape[-1]].set(v.astype(f32))

    b_pack = jnp.concatenate([brow(v) for v in rows]
                             + [jnp.zeros((1, slot_c), f32)], axis=0)            # (8, C)
    return w_pack, b_pack


# ----------------------------------------------------------------------------
# Single fused kernel: set-encoder -> GRU recurrence -> fused mu/sigma heads
# ----------------------------------------------------------------------------
def _crnn_kernel(xm_ref, x_ref, w_ref, b_ref, out_ref, *,
                 x_dim, d_in, h_dim, b, bm, n_set, t_len):
    f32 = jnp.float32
    H = h_dim
    H3 = 3 * H
    N1, N2 = 48, 32          # fused head layer widths (32+16, 16+16)

    def dot(a, w):
        return jnp.dot(a, w, preferred_element_type=f32)

    # ---- Set encoder -> h0 (1, H). Vectorized over all Bm*N rows.
    # sum_b mean_b == (1/N) * global sum; 2nd layer is linear so
    #   h0 = ((1/N) * sum(h_se)) @ W2 + Bm * b2   (exact rewrite; assumes all
    #   meta batches share set size N; summation order differs from reference).
    h_se = jnp.tanh(dot(xm_ref[...], w_ref[0, :x_dim, :H]) + b_ref[0:1, :H])    # (Bm*N, H)
    pooled = jnp.sum(h_se, axis=0, keepdims=True) * (1.0 / n_set)               # (1, H)
    h0 = dot(pooled, w_ref[1, :H, :H]) + float(bm) * b_ref[1:2, :H]             # (1, H)

    # ---- Input projections for ALL T steps, one fused (T*B, d_in)@(d_in, 3H)
    # matmul; r/z biases (input + hidden) folded in here, outside the loop.
    gi = dot(x_ref[...], w_ref[2, :d_in, :H3]) + b_ref[2:3, :H3]                # (T*B, 3H)

    # ---- GRU recurrence: one fused (B,H)@(H,3H) MXU op per step; all weight
    # loads / broadcasts hoisted out of the serial loop; h stays in vregs.
    whh = w_ref[3, :H, :H3]                                                     # (H, 3H)
    bhh_n = jnp.broadcast_to(b_ref[3:4, :H], (b, H))                            # hoisted
    h = jnp.broadcast_to(h0, (b, H))                                            # (B, H)
    hs = []
    for t in range(t_len):                                                      # T small: unroll
        g = gi[t * b:(t + 1) * b, :]                                            # (B, 3H)
        hh = dot(h, whh)                                                        # (B, 3H)
        r = jax.nn.sigmoid(g[:, :H] + hh[:, :H])
        z = jax.nn.sigmoid(g[:, H:2 * H] + hh[:, H:2 * H])
        n = jnp.tanh(g[:, 2 * H:] + r * (hh[:, 2 * H:] + bhh_n))
        h = (1.0 - z) * n + z * h
        hs.append(h)
    y = jnp.concatenate(hs, axis=0)                                             # (T*B, H)

    # ---- Fused block-diagonal mu/sigma heads; single lane-dense output slab.
    v = jnp.tanh(dot(y, w_ref[4, :H, :N1]) + b_ref[4:5, :N1])                   # (T*B, 48)
    v = jnp.tanh(dot(v, w_ref[5, :N1, :N2]) + b_ref[5:6, :N2])                  # (T*B, 32)
    out_ref[...] = jnp.tanh(dot(v, w_ref[6, :N2, :H + 1]) + b_ref[6:7, :H + 1]) # (T*B, H+1)


# ----------------------------------------------------------------------------
# Wrapper (jitted so the tiny layout transposes live in the same XLA program)
# ----------------------------------------------------------------------------
@functools.partial(jax.jit, static_argnames=("h_dim",))
def conditional_rnn_process(x_meta, x, w_pack, b_pack, *, h_dim):
    bm, x_dim, n_set = x_meta.shape
    b, d_in, t_len = x.shape

    xm = jnp.transpose(x_meta, (0, 2, 1)).reshape(bm * n_set, x_dim).astype(jnp.float32)
    xt = jnp.transpose(x, (2, 0, 1)).reshape(t_len * b, d_in).astype(jnp.float32)

    vmem = pl.BlockSpec(memory_space=pltpu.MemorySpace.VMEM)
    kernel = functools.partial(_crnn_kernel, x_dim=x_dim, d_in=d_in, h_dim=h_dim,
                               b=b, bm=bm, n_set=n_set, t_len=t_len)

    out = pl.pallas_call(
        kernel,
        out_shape=jax.ShapeDtypeStruct((t_len * b, h_dim + 1), jnp.float32),
        in_specs=[vmem, vmem, vmem, vmem],
        out_specs=vmem,
    )(xm, xt, w_pack, b_pack)

    mu = out[:, :h_dim].reshape(t_len, b, h_dim).transpose(1, 0, 2)      # (B, T, H)
    sigma = out[:, h_dim:].reshape(t_len, b, 1).transpose(1, 0, 2)       # (B, T, 1)
    return mu, sigma


# ----------------------------------------------------------------------------
# Pure-JAX reference (unpacked params, HIGHEST-precision matmuls)
# ----------------------------------------------------------------------------
def reference(x_meta, x, p):
    hdot = functools.partial(jnp.dot, precision=lax.Precision.HIGHEST)

    xm = jnp.transpose(x_meta, (0, 2, 1))                     # (Bm, N, x_dim)
    h = jnp.tanh(hdot(xm, p["se_w1"]) + p["se_b1"])
    se = hdot(h.mean(axis=1), p["se_w2"]) + p["se_b2"]        # (Bm, H)
    h0_vec = se.sum(axis=0, keepdims=True)                    # (1, H)

    b, d_in, t_len = x.shape
    h_dim = p["gru_whh_r"].shape[0]
    xb = jnp.transpose(x, (2, 0, 1))                          # (T, B, Din)
    h0 = jnp.broadcast_to(h0_vec, (b, h_dim))

    def step(h_prev, x_t):
        r = jax.nn.sigmoid(hdot(x_t, p["gru_wih_r"]) + p["gru_bih_r"]
                           + hdot(h_prev, p["gru_whh_r"]) + p["gru_bhh_r"])
        z = jax.nn.sigmoid(hdot(x_t, p["gru_wih_z"]) + p["gru_bih_z"]
                           + hdot(h_prev, p["gru_whh_z"]) + p["gru_bhh_z"])
        n = jnp.tanh(hdot(x_t, p["gru_wih_n"]) + p["gru_bih_n"]
                     + r * (hdot(h_prev, p["gru_whh_n"]) + p["gru_bhh_n"]))
        hn = (1.0 - z) * n + z * h_prev
        return hn, hn

    _, ys = lax.scan(step, h0, xb)                            # (T, B, H)

    def mlp(v, prefix):
        for i in (1, 2, 3):
            v = jnp.tanh(hdot(v, p[f"{prefix}_w{i}"]) + p[f"{prefix}_b{i}"])
        return v

    mu = jnp.transpose(mlp(ys, "mu"), (1, 0, 2))
    sg = jnp.transpose(mlp(ys, "sg"), (1, 0, 2))
    return mu, sg


def init_params(key, input_dim, h_dim, x_dim):
    shapes = {
        "se_w1": (x_dim, h_dim), "se_b1": (1, h_dim),
        "se_w2": (h_dim, h_dim), "se_b2": (1, h_dim),
        # per-gate GRU parameters, gate order r / z / n
        "gru_wih_r": (input_dim, h_dim), "gru_wih_z": (input_dim, h_dim), "gru_wih_n": (input_dim, h_dim),
        "gru_whh_r": (h_dim, h_dim), "gru_whh_z": (h_dim, h_dim), "gru_whh_n": (h_dim, h_dim),
        "gru_bih_r": (1, h_dim), "gru_bih_z": (1, h_dim), "gru_bih_n": (1, h_dim),
        "gru_bhh_r": (1, h_dim), "gru_bhh_z": (1, h_dim), "gru_bhh_n": (1, h_dim),
        "mu_w1": (h_dim, 32), "mu_b1": (1, 32),
        "mu_w2": (32, 16), "mu_b2": (1, 16),
        "mu_w3": (16, h_dim), "mu_b3": (1, h_dim),
        "sg_w1": (h_dim, 16), "sg_b1": (1, 16),
        "sg_w2": (16, 16), "sg_b2": (1, 16),
        "sg_w3": (16, 1), "sg_b3": (1, 1),
    }
    keys = jax.random.split(key, len(shapes))
    return {name: 0.1 * jax.random.normal(k, shp, dtype=jnp.float32)
            for (name, shp), k in zip(shapes.items(), keys)}


if __name__ == "__main__":
    # module hyperparams
    input_dim, rnn_hidden_dim, rnn_input_dim = 4, 32, 4
    x_dim = 4            # feature dim of x_meta
    B, T = 2, 8          # batch, sequence length
    Bm, N = 2, 16        # meta-set batch and set size

    root = jax.random.PRNGKey(0)
    kp, kx, km = jax.random.split(root, 3)
    params = init_params(kp, input_dim, rnn_hidden_dim, x_dim)
    x = jax.random.normal(kx, (B, input_dim, T), dtype=jnp.float32)
    x_meta = jax.random.normal(km, (Bm, x_dim, N), dtype=jnp.float32)

    # One-time packing (2 DMAs of parameters per kernel call instead of ~30).
    w_pack, b_pack = pack_params(params, rnn_hidden_dim)

    mu, sigma = conditional_rnn_process(x_meta, x, w_pack, b_pack, h_dim=rnn_hidden_dim)
    jax.block_until_ready((mu, sigma))

    mu_ref, sg_ref = reference(x_meta, x, params)
    assert mu.shape == (B, T, rnn_hidden_dim) and sigma.shape == (B, T, 1)
    # Kernel matmuls run at default (single-pass bf16) MXU precision; reference
    # uses Precision.HIGHEST -> documented tolerance 2e-3.
    assert jnp.allclose(mu, mu_ref, atol=2e-3), float(jnp.max(jnp.abs(mu - mu_ref)))
    assert jnp.allclose(sigma, sg_ref, atol=2e-3), float(jnp.max(jnp.abs(sigma - sg_ref)))

    print("KERNEL_OK")
</pallas_src>

<mosaic_0001>
module attributes {stable_mosaic.version = 11 : i64} {
  func.func @_crnn_kernel(%arg0: memref<32x4xf32, #tpu.memory_space<vmem>>, %arg1: memref<16x4xf32, #tpu.memory_space<vmem>>, %arg2: memref<7x48x128xf32, #tpu.memory_space<vmem>>, %arg3: memref<8x128xf32, #tpu.memory_space<vmem>>, %arg4: memref<16x33xf32, #tpu.memory_space<vmem>>) attributes {dimension_semantics = [], scalar_prefetch = 0 : i64, scratch_operands = 0 : i64, tpu.core_type = #tpu.core_type<tc>} {
    %c0 = arith.constant 0 : index
    %c0_0 = arith.constant 0 : index
    %0 = vector.load %arg0[%c0, %c0_0] : memref<32x4xf32, #tpu.memory_space<vmem>>, vector<32x4xf32>
    %c0_1 = arith.constant 0 : index
    %c0_2 = arith.constant 0 : index
    %c0_3 = arith.constant 0 : index
    %1 = vector.load %arg2[%c0_1, %c0_2, %c0_3] : memref<7x48x128xf32, #tpu.memory_space<vmem>>, vector<1x4x32xf32>
    %2 = vector.shape_cast %1 : vector<1x4x32xf32> to vector<4x32xf32>
    %cst = arith.constant dense<0.000000e+00> : vector<32x32xf32>
    %3 = tpu.matmul %0, %2, %cst {dimension_numbers = #tpu.dot_dimension_numbers<[1], [0], [0], [1], [0, 0, 1, 1], [], []>} : vector<32x4xf32>, vector<4x32xf32>, vector<32x32xf32> -> vector<32x32xf32>
    %c0_4 = arith.constant 0 : index
    %c0_5 = arith.constant 0 : index
    %4 = vector.load %arg3[%c0_4, %c0_5] : memref<8x128xf32, #tpu.memory_space<vmem>>, vector<1x32xf32>
    %5 = vector.broadcast %4 : vector<1x32xf32> to vector<32x32xf32>
    %6 = arith.addf %3, %5 : vector<32x32xf32>
    %7 = math.tanh %6 : vector<32x32xf32>
    %cst_6 = arith.constant dense<0.000000e+00> : vector<32xf32>
    %8 = vector.multi_reduction <add>, %7, %cst_6 [0] : vector<32x32xf32> to vector<32xf32>
    %9 = vector.shape_cast %8 : vector<32xf32> to vector<1x32xf32>
    %cst_7 = arith.constant 6.250000e-02 : f32
    %10 = vector.broadcast %cst_7 : f32 to vector<1x32xf32>
    %11 = arith.mulf %9, %10 : vector<1x32xf32>
    %c1 = arith.constant 1 : index
    %c0_8 = arith.constant 0 : index
    %c0_9 = arith.constant 0 : index
    %12 = vector.load %arg2[%c1, %c0_8, %c0_9] : memref<7x48x128xf32, #tpu.memory_space<vmem>>, vector<1x32x32xf32>
    %13 = vector.shape_cast %12 : vector<1x32x32xf32> to vector<32x32xf32>
    %cst_10 = arith.constant dense<0.000000e+00> : vector<1x32xf32>
    %14 = tpu.matmul %11, %13, %cst_10 {dimension_numbers = #tpu.dot_dimension_numbers<[1], [0], [0], [1], [0, 0, 1, 1], [], []>} : vector<1x32xf32>, vector<32x32xf32>, vector<1x32xf32> -> vector<1x32xf32>
    %c1_11 = arith.constant 1 : index
    %c0_12 = arith.constant 0 : index
    %15 = vector.load %arg3[%c1_11, %c0_12] : memref<8x128xf32, #tpu.memory_space<vmem>>, vector<1x32xf32>
    %cst_13 = arith.constant 2.000000e+00 : f32
    %16 = vector.broadcast %cst_13 : f32 to vector<1x32xf32>
    %17 = arith.mulf %16, %15 : vector<1x32xf32>
    %18 = arith.addf %14, %17 : vector<1x32xf32>
    %c0_14 = arith.constant 0 : index
    %c0_15 = arith.constant 0 : index
    %19 = vector.load %arg1[%c0_14, %c0_15] : memref<16x4xf32, #tpu.memory_space<vmem>>, vector<16x4xf32>
    %c2 = arith.constant 2 : index
    %c0_16 = arith.constant 0 : index
    %c0_17 = arith.constant 0 : index
    %20 = vector.load %arg2[%c2, %c0_16, %c0_17] : memref<7x48x128xf32, #tpu.memory_space<vmem>>, vector<1x4x96xf32>
    %21 = vector.shape_cast %20 : vector<1x4x96xf32> to vector<4x96xf32>
    %cst_18 = arith.constant dense<0.000000e+00> : vector<16x96xf32>
    %22 = tpu.matmul %19, %21, %cst_18 {dimension_numbers = #tpu.dot_dimension_numbers<[1], [0], [0], [1], [0, 0, 1, 1], [], []>} : vector<16x4xf32>, vector<4x96xf32>, vector<16x96xf32> -> vector<16x96xf32>
    %c2_19 = arith.constant 2 : index
    %c0_20 = arith.constant 0 : index
    %23 = vector.load %arg3[%c2_19, %c0_20] : memref<8x128xf32, #tpu.memory_space<vmem>>, vector<1x96xf32>
    %24 = vector.broadcast %23 : vector<1x96xf32> to vector<16x96xf32>
    %25 = arith.addf %22, %24 : vector<16x96xf32>
    %c3 = arith.constant 3 : index
    %c0_21 = arith.constant 0 : index
    %c0_22 = arith.constant 0 : index
    %26 = vector.load %arg2[%c3, %c0_21, %c0_22] : memref<7x48x128xf32, #tpu.memory_space<vmem>>, vector<1x32x96xf32>
    %27 = vector.shape_cast %26 : vector<1x32x96xf32> to vector<32x96xf32>
    %c3_23 = arith.constant 3 : index
    %c0_24 = arith.constant 0 : index
    %28 = vector.load %arg3[%c3_23, %c0_24] : memref<8x128xf32, #tpu.memory_space<vmem>>, vector<1x32xf32>
    %29 = vector.shape_cast %28 : vector<1x32xf32> to vector<1x32xf32>
    %30 = vector.broadcast %29 : vector<1x32xf32> to vector<2x32xf32>
    %31 = vector.shape_cast %18 : vector<1x32xf32> to vector<1x32xf32>
    %32 = vector.broadcast %31 : vector<1x32xf32> to vector<2x32xf32>
    %33 = vector.extract_strided_slice %25 {offsets = [0, 0], sizes = [2, 96], strides = [1, 1]} : vector<16x96xf32> to vector<2x96xf32>
    %cst_25 = arith.constant dense<0.000000e+00> : vector<2x96xf32>
    %34 = tpu.matmul %32, %27, %cst_25 {dimension_numbers = #tpu.dot_dimension_numbers<[1], [0], [0], [1], [0, 0, 1, 1], [], []>} : vector<2x32xf32>, vector<32x96xf32>, vector<2x96xf32> -> vector<2x96xf32>
    %35 = vector.extract_strided_slice %33 {offsets = [0, 0], sizes = [2, 32], strides = [1, 1]} : vector<2x96xf32> to vector<2x32xf32>
    %36 = vector.extract_strided_slice %34 {offsets = [0, 0], sizes = [2, 32], strides = [1, 1]} : vector<2x96xf32> to vector<2x32xf32>
    %37 = arith.addf %35, %36 : vector<2x32xf32>
    %38 = arith.negf %37 : vector<2x32xf32>
    %39 = math.exp %38 : vector<2x32xf32>
    %cst_26 = arith.constant 1.000000e+00 : f32
    %40 = vector.broadcast %cst_26 : f32 to vector<2x32xf32>
    %41 = arith.addf %40, %39 : vector<2x32xf32>
    %42 = arith.divf %40, %41 : vector<2x32xf32>
    %43 = vector.extract_strided_slice %33 {offsets = [0, 32], sizes = [2, 32], strides = [1, 1]} : vector<2x96xf32> to vector<2x32xf32>
    %44 = vector.extract_strided_slice %34 {offsets = [0, 32], sizes = [2, 32], strides = [1, 1]} : vector<2x96xf32> to vector<2x32xf32>
    %45 = arith.addf %43, %44 : vector<2x32xf32>
    %46 = arith.negf %45 : vector<2x32xf32>
    %47 = math.exp %46 : vector<2x32xf32>
    %cst_27 = arith.constant 1.000000e+00 : f32
    %48 = vector.broadcast %cst_27 : f32 to vector<2x32xf32>
    %49 = arith.addf %48, %47 : vector<2x32xf32>
    %50 = arith.divf %48, %49 : vector<2x32xf32>
    %51 = vector.extract_strided_slice %33 {offsets = [0, 64], sizes = [2, 32], strides = [1, 1]} : vector<2x96xf32> to vector<2x32xf32>
    %52 = vector.extract_strided_slice %34 {offsets = [0, 64], sizes = [2, 32], strides = [1, 1]} : vector<2x96xf32> to vector<2x32xf32>
    %53 = arith.addf %52, %30 : vector<2x32xf32>
    %54 = arith.mulf %42, %53 : vector<2x32xf32>
    %55 = arith.addf %51, %54 : vector<2x32xf32>
    %56 = math.tanh %55 : vector<2x32xf32>
    %cst_28 = arith.constant 1.000000e+00 : f32
    %57 = vector.broadcast %cst_28 : f32 to vector<2x32xf32>
    %58 = arith.subf %57, %50 : vector<2x32xf32>
    %59 = arith.mulf %58, %56 : vector<2x32xf32>
    %60 = arith.mulf %50, %32 : vector<2x32xf32>
    %61 = arith.addf %59, %60 : vector<2x32xf32>
    %62 = vector.extract_strided_slice %25 {offsets = [2, 0], sizes = [2, 96], strides = [1, 1]} : vector<16x96xf32> to vector<2x96xf32>
    %cst_29 = arith.constant dense<0.000000e+00> : vector<2x96xf32>
    %63 = tpu.matmul %61, %27, %cst_29 {dimension_numbers = #tpu.dot_dimension_numbers<[1], [0], [0], [1], [0, 0, 1, 1], [], []>} : vector<2x32xf32>, vector<32x96xf32>, vector<2x96xf32> -> vector<2x96xf32>
    %64 = vector.extract_strided_slice %62 {offsets = [0, 0], sizes = [2, 32], strides = [1, 1]} : vector<2x96xf32> to vector<2x32xf32>
    %65 = vector.extract_strided_slice %63 {offsets = [0, 0], sizes = [2, 32], strides = [1, 1]} : vector<2x96xf32> to vector<2x32xf32>
    %66 = arith.addf %64, %65 : vector<2x32xf32>
    %67 = arith.negf %66 : vector<2x32xf32>
    %68 = math.exp %67 : vector<2x32xf32>
    %cst_30 = arith.constant 1.000000e+00 : f32
    %69 = vector.broadcast %cst_30 : f32 to vector<2x32xf32>
    %70 = arith.addf %69, %68 : vector<2x32xf32>
    %71 = arith.divf %69, %70 : vector<2x32xf32>
    %72 = vector.extract_strided_slice %62 {offsets = [0, 32], sizes = [2, 32], strides = [1, 1]} : vector<2x96xf32> to vector<2x32xf32>
    %73 = vector.extract_strided_slice %63 {offsets = [0, 32], sizes = [2, 32], strides = [1, 1]} : vector<2x96xf32> to vector<2x32xf32>
    %74 = arith.addf %72, %73 : vector<2x32xf32>
    %75 = arith.negf %74 : vector<2x32xf32>
    %76 = math.exp %75 : vector<2x32xf32>
    %cst_31 = arith.constant 1.000000e+00 : f32
    %77 = vector.broadcast %cst_31 : f32 to vector<2x32xf32>
    %78 = arith.addf %77, %76 : vector<2x32xf32>
    %79 = arith.divf %77, %78 : vector<2x32xf32>
    %80 = vector.extract_strided_slice %62 {offsets = [0, 64], sizes = [2, 32], strides = [1, 1]} : vector<2x96xf32> to vector<2x32xf32>
    %81 = vector.extract_strided_slice %63 {offsets = [0, 64], sizes = [2, 32], strides = [1, 1]} : vector<2x96xf32> to vector<2x32xf32>
    %82 = arith.addf %81, %30 : vector<2x32xf32>
    %83 = arith.mulf %71, %82 : vector<2x32xf32>
    %84 = arith.addf %80, %83 : vector<2x32xf32>
    %85 = math.tanh %84 : vector<2x32xf32>
    %cst_32 = arith.constant 1.000000e+00 : f32
    %86 = vector.broadcast %cst_32 : f32 to vector<2x32xf32>
    %87 = arith.subf %86, %79 : vector<2x32xf32>
    %88 = arith.mulf %87, %85 : vector<2x32xf32>
    %89 = arith.mulf %79, %61 : vector<2x32xf32>
    %90 = arith.addf %88, %89 : vector<2x32xf32>
    %91 = vector.extract_strided_slice %25 {offsets = [4, 0], sizes = [2, 96], strides = [1, 1]} : vector<16x96xf32> to vector<2x96xf32>
    %cst_33 = arith.constant dense<0.000000e+00> : vector<2x96xf32>
    %92 = tpu.matmul %90, %27, %cst_33 {dimension_numbers = #tpu.dot_dimension_numbers<[1], [0], [0], [1], [0, 0, 1, 1], [], []>} : vector<2x32xf32>, vector<32x96xf32>, vector<2x96xf32> -> vector<2x96xf32>
    %93 = vector.extract_strided_slice %91 {offsets = [0, 0], sizes = [2, 32], strides = [1, 1]} : vector<2x96xf32> to vector<2x32xf32>
    %94 = vector.extract_strided_slice %92 {offsets = [0, 0], sizes = [2, 32], strides = [1, 1]} : vector<2x96xf32> to vector<2x32xf32>
    %95 = arith.addf %93, %94 : vector<2x32xf32>
    %96 = arith.negf %95 : vector<2x32xf32>
    %97 = math.exp %96 : vector<2x32xf32>
    %cst_34 = arith.constant 1.000000e+00 : f32
    %98 = vector.broadcast %cst_34 : f32 to vector<2x32xf32>
    %99 = arith.addf %98, %97 : vector<2x32xf32>
    %100 = arith.divf %98, %99 : vector<2x32xf32>
    %101 = vector.extract_strided_slice %91 {offsets = [0, 32], sizes = [2, 32], strides = [1, 1]} : vector<2x96xf32> to vector<2x32xf32>
    %102 = vector.extract_strided_slice %92 {offsets = [0, 32], sizes = [2, 32], strides = [1, 1]} : vector<2x96xf32> to vector<2x32xf32>
    %103 = arith.addf %101, %102 : vector<2x32xf32>
    %104 = arith.negf %103 : vector<2x32xf32>
    %105 = math.exp %104 : vector<2x32xf32>
    %cst_35 = arith.constant 1.000000e+00 : f32
    %106 = vector.broadcast %cst_35 : f32 to vector<2x32xf32>
    %107 = arith.addf %106, %105 : vector<2x32xf32>
    %108 = arith.divf %106, %107 : vector<2x32xf32>
    %109 = vector.extract_strided_slice %91 {offsets = [0, 64], sizes = [2, 32], strides = [1, 1]} : vector<2x96xf32> to vector<2x32xf32>
    %110 = vector.extract_strided_slice %92 {offsets = [0, 64], sizes = [2, 32], strides = [1, 1]} : vector<2x96xf32> to vector<2x32xf32>
    %111 = arith.addf %110, %30 : vector<2x32xf32>
    %112 = arith.mulf %100, %111 : vector<2x32xf32>
    %113 = arith.addf %109, %112 : vector<2x32xf32>
    %114 = math.tanh %113 : vector<2x32xf32>
    %cst_36 = arith.constant 1.000000e+00 : f32
    %115 = vector.broadcast %cst_36 : f32 to vector<2x32xf32>
    %116 = arith.subf %115, %108 : vector<2x32xf32>
    %117 = arith.mulf %116, %114 : vector<2x32xf32>
    %118 = arith.mulf %108, %90 : vector<2x32xf32>
    %119 = arith.addf %117, %118 : vector<2x32xf32>
    %120 = vector.extract_strided_slice %25 {offsets = [6, 0], sizes = [2, 96], strides = [1, 1]} : vector<16x96xf32> to vector<2x96xf32>
    %cst_37 = arith.constant dense<0.000000e+00> : vector<2x96xf32>
    %121 = tpu.matmul %119, %27, %cst_37 {dimension_numbers = #tpu.dot_dimension_numbers<[1], [0], [0], [1], [0, 0, 1, 1], [], []>} : vector<2x32xf32>, vector<32x96xf32>, vector<2x96xf32> -> vector<2x96xf32>
    %122 = vector.extract_strided_slice %120 {offsets = [0, 0], sizes = [2, 32], strides = [1, 1]} : vector<2x96xf32> to vector<2x32xf32>
    %123 = vector.extract_strided_slice %121 {offsets = [0, 0], sizes = [2, 32], strides = [1, 1]} : vector<2x96xf32> to vector<2x32xf32>
    %124 = arith.addf %122, %123 : vector<2x32xf32>
    %125 = arith.negf %124 : vector<2x32xf32>
    %126 = math.exp %125 : vector<2x32xf32>
    %cst_38 = arith.constant 1.000000e+00 : f32
    %127 = vector.broadcast %cst_38 : f32 to vector<2x32xf32>
    %128 = arith.addf %127, %126 : vector<2x32xf32>
    %129 = arith.divf %127, %128 : vector<2x32xf32>
    %130 = vector.extract_strided_slice %120 {offsets = [0, 32], sizes = [2, 32], strides = [1, 1]} : vector<2x96xf32> to vector<2x32xf32>
    %131 = vector.extract_strided_slice %121 {offsets = [0, 32], sizes = [2, 32], strides = [1, 1]} : vector<2x96xf32> to vector<2x32xf32>
    %132 = arith.addf %130, %131 : vector<2x32xf32>
    %133 = arith.negf %132 : vector<2x32xf32>
    %134 = math.exp %133 : vector<2x32xf32>
    %cst_39 = arith.constant 1.000000e+00 : f32
    %135 = vector.broadcast %cst_39 : f32 to vector<2x32xf32>
    %136 = arith.addf %135, %134 : vector<2x32xf32>
    %137 = arith.divf %135, %136 : vector<2x32xf32>
    %138 = vector.extract_strided_slice %120 {offsets = [0, 64], sizes = [2, 32], strides = [1, 1]} : vector<2x96xf32> to vector<2x32xf32>
    %139 = vector.extract_strided_slice %121 {offsets = [0, 64], sizes = [2, 32], strides = [1, 1]} : vector<2x96xf32> to vector<2x32xf32>
    %140 = arith.addf %139, %30 : vector<2x32xf32>
    %141 = arith.mulf %129, %140 : vector<2x32xf32>
    %142 = arith.addf %138, %141 : vector<2x32xf32>
    %143 = math.tanh %142 : vector<2x32xf32>
    %cst_40 = arith.constant 1.000000e+00 : f32
    %144 = vector.broadcast %cst_40 : f32 to vector<2x32xf32>
    %145 = arith.subf %144, %137 : vector<2x32xf32>
    %146 = arith.mulf %145, %143 : vector<2x32xf32>
    %147 = arith.mulf %137, %119 : vector<2x32xf32>
    %148 = arith.addf %146, %147 : vector<2x32xf32>
    %149 = vector.extract_strided_slice %25 {offsets = [8, 0], sizes = [2, 96], strides = [1, 1]} : vector<16x96xf32> to vector<2x96xf32>
    %cst_41 = arith.constant dense<0.000000e+00> : vector<2x96xf32>
    %150 = tpu.matmul %148, %27, %cst_41 {dimension_numbers = #tpu.dot_dimension_numbers<[1], [0], [0], [1], [0, 0, 1, 1], [], []>} : vector<2x32xf32>, vector<32x96xf32>, vector<2x96xf32> -> vector<2x96xf32>
    %151 = vector.extract_strided_slice %149 {offsets = [0, 0], sizes = [2, 32], strides = [1, 1]} : vector<2x96xf32> to vector<2x32xf32>
    %152 = vector.extract_strided_slice %150 {offsets = [0, 0], sizes = [2, 32], strides = [1, 1]} : vector<2x96xf32> to vector<2x32xf32>
    %153 = arith.addf %151, %152 : vector<2x32xf32>
    %154 = arith.negf %153 : vector<2x32xf32>
    %155 = math.exp %154 : vector<2x32xf32>
    %cst_42 = arith.constant 1.000000e+00 : f32
    %156 = vector.broadcast %cst_42 : f32 to vector<2x32xf32>
    %157 = arith.addf %156, %155 : vector<2x32xf32>
    %158 = arith.divf %156, %157 : vector<2x32xf32>
    %159 = vector.extract_strided_slice %149 {offsets = [0, 32], sizes = [2, 32], strides = [1, 1]} : vector<2x96xf32> to vector<2x32xf32>
    %160 = vector.extract_strided_slice %150 {offsets = [0, 32], sizes = [2, 32], strides = [1, 1]} : vector<2x96xf32> to vector<2x32xf32>
    %161 = arith.addf %159, %160 : vector<2x32xf32>
    %162 = arith.negf %161 : vector<2x32xf32>
    %163 = math.exp %162 : vector<2x32xf32>
    %cst_43 = arith.constant 1.000000e+00 : f32
    %164 = vector.broadcast %cst_43 : f32 to vector<2x32xf32>
    %165 = arith.addf %164, %163 : vector<2x32xf32>
    %166 = arith.divf %164, %165 : vector<2x32xf32>
    %167 = vector.extract_strided_slice %149 {offsets = [0, 64], sizes = [2, 32], strides = [1, 1]} : vector<2x96xf32> to vector<2x32xf32>
    %168 = vector.extract_strided_slice %150 {offsets = [0, 64], sizes = [2, 32], strides = [1, 1]} : vector<2x96xf32> to vector<2x32xf32>
    %169 = arith.addf %168, %30 : vector<2x32xf32>
    %170 = arith.mulf %158, %169 : vector<2x32xf32>
    %171 = arith.addf %167, %170 : vector<2x32xf32>
    %172 = math.tanh %171 : vector<2x32xf32>
    %cst_44 = arith.constant 1.000000e+00 : f32
    %173 = vector.broadcast %cst_44 : f32 to vector<2x32xf32>
    %174 = arith.subf %173, %166 : vector<2x32xf32>
    %175 = arith.mulf %174, %172 : vector<2x32xf32>
    %176 = arith.mulf %166, %148 : vector<2x32xf32>
    %177 = arith.addf %175, %176 : vector<2x32xf32>
    %178 = vector.extract_strided_slice %25 {offsets = [10, 0], sizes = [2, 96], strides = [1, 1]} : vector<16x96xf32> to vector<2x96xf32>
    %cst_45 = arith.constant dense<0.000000e+00> : vector<2x96xf32>
    %179 = tpu.matmul %177, %27, %cst_45 {dimension_numbers = #tpu.dot_dimension_numbers<[1], [0], [0], [1], [0, 0, 1, 1], [], []>} : vector<2x32xf32>, vector<32x96xf32>, vector<2x96xf32> -> vector<2x96xf32>
    %180 = vector.extract_strided_slice %178 {offsets = [0, 0], sizes = [2, 32], strides = [1, 1]} : vector<2x96xf32> to vector<2x32xf32>
    %181 = vector.extract_strided_slice %179 {offsets = [0, 0], sizes = [2, 32], strides = [1, 1]} : vector<2x96xf32> to vector<2x32xf32>
    %182 = arith.addf %180, %181 : vector<2x32xf32>
    %183 = arith.negf %182 : vector<2x32xf32>
    %184 = math.exp %183 : vector<2x32xf32>
    %cst_46 = arith.constant 1.000000e+00 : f32
    %185 = vector.broadcast %cst_46 : f32 to vector<2x32xf32>
    %186 = arith.addf %185, %184 : vector<2x32xf32>
    %187 = arith.divf %185, %186 : vector<2x32xf32>
    %188 = vector.extract_strided_slice %178 {offsets = [0, 32], sizes = [2, 32], strides = [1, 1]} : vector<2x96xf32> to vector<2x32xf32>
    %189 = vector.extract_strided_slice %179 {offsets = [0, 32], sizes = [2, 32], strides = [1, 1]} : vector<2x96xf32> to vector<2x32xf32>
    %190 = arith.addf %188, %189 : vector<2x32xf32>
    %191 = arith.negf %190 : vector<2x32xf32>
    %192 = math.exp %191 : vector<2x32xf32>
    %cst_47 = arith.constant 1.000000e+00 : f32
    %193 = vector.broadcast %cst_47 : f32 to vector<2x32xf32>
    %194 = arith.addf %193, %192 : vector<2x32xf32>
    %195 = arith.divf %193, %194 : vector<2x32xf32>
    %196 = vector.extract_strided_slice %178 {offsets = [0, 64], sizes = [2, 32], strides = [1, 1]} : vector<2x96xf32> to vector<2x32xf32>
    %197 = vector.extract_strided_slice %179 {offsets = [0, 64], sizes = [2, 32], strides = [1, 1]} : vector<2x96xf32> to vector<2x32xf32>
    %198 = arith.addf %197, %30 : vector<2x32xf32>
    %199 = arith.mulf %187, %198 : vector<2x32xf32>
    %200 = arith.addf %196, %199 : vector<2x32xf32>
    %201 = math.tanh %200 : vector<2x32xf32>
    %cst_48 = arith.constant 1.000000e+00 : f32
    %202 = vector.broadcast %cst_48 : f32 to vector<2x32xf32>
    %203 = arith.subf %202, %195 : vector<2x32xf32>
    %204 = arith.mulf %203, %201 : vector<2x32xf32>
    %205 = arith.mulf %195, %177 : vector<2x32xf32>
    %206 = arith.addf %204, %205 : vector<2x32xf32>
    %207 = vector.extract_strided_slice %25 {offsets = [12, 0], sizes = [2, 96], strides = [1, 1]} : vector<16x96xf32> to vector<2x96xf32>
    %cst_49 = arith.constant dense<0.000000e+00> : vector<2x96xf32>
    %208 = tpu.matmul %206, %27, %cst_49 {dimension_numbers = #tpu.dot_dimension_numbers<[1], [0], [0], [1], [0, 0, 1, 1], [], []>} : vector<2x32xf32>, vector<32x96xf32>, vector<2x96xf32> -> vector<2x96xf32>
    %209 = vector.extract_strided_slice %207 {offsets = [0, 0], sizes = [2, 32], strides = [1, 1]} : vector<2x96xf32> to vector<2x32xf32>
    %210 = vector.extract_strided_slice %208 {offsets = [0, 0], sizes = [2, 32], strides = [1, 1]} : vector<2x96xf32> to vector<2x32xf32>
    %211 = arith.addf %209, %210 : vector<2x32xf32>
    %212 = arith.negf %211 : vector<2x32xf32>
    %213 = math.exp %212 : vector<2x32xf32>
    %cst_50 = arith.constant 1.000000e+00 : f32
    %214 = vector.broadcast %cst_50 : f32 to vector<2x32xf32>
    %215 = arith.addf %214, %213 : vector<2x32xf32>
    %216 = arith.divf %214, %215 : vector<2x32xf32>
    %217 = vector.extract_strided_slice %207 {offsets = [0, 32], sizes = [2, 32], strides = [1, 1]} : vector<2x96xf32> to vector<2x32xf32>
    %218 = vector.extract_strided_slice %208 {offsets = [0, 32], sizes = [2, 32], strides = [1, 1]} : vector<2x96xf32> to vector<2x32xf32>
    %219 = arith.addf %217, %218 : vector<2x32xf32>
    %220 = arith.negf %219 : vector<2x32xf32>
    %221 = math.exp %220 : vector<2x32xf32>
    %cst_51 = arith.constant 1.000000e+00 : f32
    %222 = vector.broadcast %cst_51 : f32 to vector<2x32xf32>
    %223 = arith.addf %222, %221 : vector<2x32xf32>
    %224 = arith.divf %222, %223 : vector<2x32xf32>
    %225 = vector.extract_strided_slice %207 {offsets = [0, 64], sizes = [2, 32], strides = [1, 1]} : vector<2x96xf32> to vector<2x32xf32>
    %226 = vector.extract_strided_slice %208 {offsets = [0, 64], sizes = [2, 32], strides = [1, 1]} : vector<2x96xf32> to vector<2x32xf32>
    %227 = arith.addf %226, %30 : vector<2x32xf32>
    %228 = arith.mulf %216, %227 : vector<2x32xf32>
    %229 = arith.addf %225, %228 : vector<2x32xf32>
    %230 = math.tanh %229 : vector<2x32xf32>
    %cst_52 = arith.constant 1.000000e+00 : f32
    %231 = vector.broadcast %cst_52 : f32 to vector<2x32xf32>
    %232 = arith.subf %231, %224 : vector<2x32xf32>
    %233 = arith.mulf %232, %230 : vector<2x32xf32>
    %234 = arith.mulf %224, %206 : vector<2x32xf32>
    %235 = arith.addf %233, %234 : vector<2x32xf32>
    %236 = vector.extract_strided_slice %25 {offsets = [14, 0], sizes = [2, 96], strides = [1, 1]} : vector<16x96xf32> to vector<2x96xf32>
    %cst_53 = arith.constant dense<0.000000e+00> : vector<2x96xf32>
    %237 = tpu.matmul %235, %27, %cst_53 {dimension_numbers = #tpu.dot_dimension_numbers<[1], [0], [0], [1], [0, 0, 1, 1], [], []>} : vector<2x32xf32>, vector<32x96xf32>, vector<2x96xf32> -> vector<2x96xf32>
    %238 = vector.extract_strided_slice %236 {offsets = [0, 0], sizes = [2, 32], strides = [1, 1]} : vector<2x96xf32> to vector<2x32xf32>
    %239 = vector.extract_strided_slice %237 {offsets = [0, 0], sizes = [2, 32], strides = [1, 1]} : vector<2x96xf32> to vector<2x32xf32>
    %240 = arith.addf %238, %239 : vector<2x32xf32>
    %241 = arith.negf %240 : vector<2x32xf32>
    %242 = math.exp %241 : vector<2x32xf32>
    %cst_54 = arith.constant 1.000000e+00 : f32
    %243 = vector.broadcast %cst_54 : f32 to vector<2x32xf32>
    %244 = arith.addf %243, %242 : vector<2x32xf32>
    %245 = arith.divf %243, %244 : vector<2x32xf32>
    %246 = vector.extract_strided_slice %236 {offsets = [0, 32], sizes = [2, 32], strides = [1, 1]} : vector<2x96xf32> to vector<2x32xf32>
    %247 = vector.extract_strided_slice %237 {offsets = [0, 32], sizes = [2, 32], strides = [1, 1]} : vector<2x96xf32> to vector<2x32xf32>
    %248 = arith.addf %246, %247 : vector<2x32xf32>
    %249 = arith.negf %248 : vector<2x32xf32>
    %250 = math.exp %249 : vector<2x32xf32>
    %cst_55 = arith.constant 1.000000e+00 : f32
    %251 = vector.broadcast %cst_55 : f32 to vector<2x32xf32>
    %252 = arith.addf %251, %250 : vector<2x32xf32>
    %253 = arith.divf %251, %252 : vector<2x32xf32>
    %254 = vector.extract_strided_slice %236 {offsets = [0, 64], sizes = [2, 32], strides = [1, 1]} : vector<2x96xf32> to vector<2x32xf32>
    %255 = vector.extract_strided_slice %237 {offsets = [0, 64], sizes = [2, 32], strides = [1, 1]} : vector<2x96xf32> to vector<2x32xf32>
    %256 = arith.addf %255, %30 : vector<2x32xf32>
    %257 = arith.mulf %245, %256 : vector<2x32xf32>
    %258 = arith.addf %254, %257 : vector<2x32xf32>
    %259 = math.tanh %258 : vector<2x32xf32>
    %cst_56 = arith.constant 1.000000e+00 : f32
    %260 = vector.broadcast %cst_56 : f32 to vector<2x32xf32>
    %261 = arith.subf %260, %253 : vector<2x32xf32>
    %262 = arith.mulf %261, %259 : vector<2x32xf32>
    %263 = arith.mulf %253, %235 : vector<2x32xf32>
    %264 = arith.addf %262, %263 : vector<2x32xf32>
    %265 = tpu.concatenate %61, %90, %119, %148, %177, %206, %235, %264 in 0 : vector<2x32xf32>, vector<2x32xf32>, vector<2x32xf32>, vector<2x32xf32>, vector<2x32xf32>, vector<2x32xf32>, vector<2x32xf32>, vector<2x32xf32> -> vector<16x32xf32>
    %c4 = arith.constant 4 : index
    %c0_57 = arith.constant 0 : index
    %c0_58 = arith.constant 0 : index
    %266 = vector.load %arg2[%c4, %c0_57, %c0_58] : memref<7x48x128xf32, #tpu.memory_space<vmem>>, vector<1x32x48xf32>
    %267 = vector.shape_cast %266 : vector<1x32x48xf32> to vector<32x48xf32>
    %cst_59 = arith.constant dense<0.000000e+00> : vector<16x48xf32>
    %268 = tpu.matmul %265, %267, %cst_59 {dimension_numbers = #tpu.dot_dimension_numbers<[1], [0], [0], [1], [0, 0, 1, 1], [], []>} : vector<16x32xf32>, vector<32x48xf32>, vector<16x48xf32> -> vector<16x48xf32>
    %c4_60 = arith.constant 4 : index
    %c0_61 = arith.constant 0 : index
    %269 = vector.load %arg3[%c4_60, %c0_61] : memref<8x128xf32, #tpu.memory_space<vmem>>, vector<1x48xf32>
    %270 = vector.broadcast %269 : vector<1x48xf32> to vector<16x48xf32>
    %271 = arith.addf %268, %270 : vector<16x48xf32>
    %272 = math.tanh %271 : vector<16x48xf32>
    %c5 = arith.constant 5 : index
    %c0_62 = arith.constant 0 : index
    %c0_63 = arith.constant 0 : index
    %273 = vector.load %arg2[%c5, %c0_62, %c0_63] : memref<7x48x128xf32, #tpu.memory_space<vmem>>, vector<1x48x32xf32>
    %274 = vector.shape_cast %273 : vector<1x48x32xf32> to vector<48x32xf32>
    %cst_64 = arith.constant dense<0.000000e+00> : vector<16x32xf32>
    %275 = tpu.matmul %272, %274, %cst_64 {dimension_numbers = #tpu.dot_dimension_numbers<[1], [0], [0], [1], [0, 0, 1, 1], [], []>} : vector<16x48xf32>, vector<48x32xf32>, vector<16x32xf32> -> vector<16x32xf32>
    %c5_65 = arith.constant 5 : index
    %c0_66 = arith.constant 0 : index
    %276 = vector.load %arg3[%c5_65, %c0_66] : memref<8x128xf32, #tpu.memory_space<vmem>>, vector<1x32xf32>
    %277 = vector.broadcast %276 : vector<1x32xf32> to vector<16x32xf32>
    %278 = arith.addf %275, %277 : vector<16x32xf32>
    %279 = math.tanh %278 : vector<16x32xf32>
    %c6 = arith.constant 6 : index
    %c0_67 = arith.constant 0 : index
    %c0_68 = arith.constant 0 : index
    %280 = vector.load %arg2[%c6, %c0_67, %c0_68] : memref<7x48x128xf32, #tpu.memory_space<vmem>>, vector<1x32x33xf32>
    %281 = vector.shape_cast %280 : vector<1x32x33xf32> to vector<32x33xf32>
    %cst_69 = arith.constant dense<0.000000e+00> : vector<16x33xf32>
    %282 = tpu.matmul %279, %281, %cst_69 {dimension_numbers = #tpu.dot_dimension_numbers<[1], [0], [0], [1], [0, 0, 1, 1], [], []>} : vector<16x32xf32>, vector<32x33xf32>, vector<16x33xf32> -> vector<16x33xf32>
    %c6_70 = arith.constant 6 : index
    %c0_71 = arith.constant 0 : index
    %283 = vector.load %arg3[%c6_70, %c0_71] : memref<8x128xf32, #tpu.memory_space<vmem>>, vector<1x33xf32>
    %284 = vector.broadcast %283 : vector<1x33xf32> to vector<16x33xf32>
    %285 = arith.addf %282, %284 : vector<16x33xf32>
    %286 = math.tanh %285 : vector<16x33xf32>
    %c0_72 = arith.constant 0 : index
    %c0_73 = arith.constant 0 : index
    %287 = vector.load %arg4[%c0_72, %c0_73] : memref<16x33xf32, #tpu.memory_space<vmem>>, vector<16x33xf32>
    tpu.vector_store %arg4[%c0_72, %c0_73], %286 {strides = array<i32>} : memref<16x33xf32, #tpu.memory_space<vmem>>, vector<16x33xf32>,
    return
  }
}

</mosaic_0001>

<llo_original>
// kernel: conditional_rnn_process.1
$region0: #{conditional_rnn_process.1}
  #allocation0 [shape = 'u32[]', space=smem, size = 0x4, offset = 0x4, fixed_abs, tag = 'smem constant byte address 0x4 - core index']
  #allocation1 [shape = 'u32[144,128]{1,0:T(1,128)}', space=vmem, size = 0x12000, scoped, tag = 'internal scratch']
  %s0 = inlined_call_operand.vmem [shape: f32[32,4], index: 0, kind: input, shape index: {}]
  %s1 = inlined_call_operand.vmem [shape: f32[16,4], index: 1, kind: input, shape index: {}]
  %s2 = inlined_call_operand.hbm [shape: f32[7,48,128], index: 2, kind: input, shape index: {}]
  %s3 = inlined_call_operand.vmem [shape: f32[8,128], index: 3, kind: input, shape index: {}]
  %s4 = inlined_call_operand.vmem [shape: f32[16,33], index: 4, kind: output, shape index: {}]
  %s5 = sld [smem:[#allocation0]]
  $region30: #{conditional_rnn_process.1} parent=0
    _
  %s7 = ssub.s32 1, %s5
  %s8 = scalar_select 0, %s7, %s5
  $region1: #{conditional_rnn_process.1} parent=0
    #allocation2 [shape = 'u8[172032]{0}', space=vmem, size = 0x2a000, scoped, tag = 'input window, operand 2, single buffered']
    #allocation3 [shape = 's32[1]{0}', space=sflag, size = 0x4, scoped, tag = 'scoped memory for conditional_rnn_process.1']
    %9 = vsyncpa [#allocation3], 0
    // Predicated region
    $region2: #{conditional_rnn_process.1} parent=1 // pred_check
      _
    $region3: #{conditional_rnn_process.1} parent=1 // pred_check_branch
      %11 = sbr.rel (0) target = $region5
    $region4: #{conditional_rnn_process.1} parent=1 // pred_region
      _
    $region5: #{conditional_rnn_process.1} parent=1 // pred_fallthru
      _
    // Predicated region
    $region6: #{conditional_rnn_process.1} parent=1 // pred_check
      _
    $region7: #{conditional_rnn_process.1} parent=1 // pred_check_branch
      %13 = sbr.rel (0) target = $region9
    $region8: #{conditional_rnn_process.1} parent=1 // pred_region
      _
    $region9: #{conditional_rnn_process.1} parent=1 // pred_fallthru
      _
    // Predicated region
    $region10: #{conditional_rnn_process.1} parent=1 // pred_check
      _
    $region11: #{conditional_rnn_process.1} parent=1 // pred_check_branch
      %15 = sbr.rel (0) target = $region13
    $region12: #{conditional_rnn_process.1} parent=1 // pred_region
      %s17 = ssub.s32 5376, 5376
      %18 = vsyncadd [#allocation3], %s17
      %s19 = sshll.u32 [#allocation2], 4
      %s20 = int_to_ptr.vmem [resolvable:$true] %s19
      %25 = dma.hbm_to_vmem [thread:$0]  %s2, 5376, %s20, [#allocation3], 128, 128, 8
    $region13: #{conditional_rnn_process.1} parent=1 // pred_fallthru
      _
    // Predicated region
    $region14: #{conditional_rnn_process.1} parent=1 // pred_check
      _
    $region15: #{conditional_rnn_process.1} parent=1 // pred_check_branch
      %27 = sbr.rel (0) target = $region17
    $region16: #{conditional_rnn_process.1} parent=1 // pred_region
      _
    $region17: #{conditional_rnn_process.1} parent=1 // pred_fallthru
      _
    // Predicated region
    $region18: #{conditional_rnn_process.1} parent=1 // pred_check
      _
    $region19: #{conditional_rnn_process.1} parent=1 // pred_check_branch
      %29 = sbr.rel (0) target = $region21
    $region20: #{conditional_rnn_process.1} parent=1 // pred_region
      %30 = dma.done [#allocation3], 5376
    $region21: #{conditional_rnn_process.1} parent=1 // pred_fallthru
      _
    %v31 = vld [vmem:[%s0] sm:$0xff]
    %v32 = vld [vmem:[%s0 + $0x8] sm:$0xff]
    %v33 = vld [vmem:[%s0 + $0x10] sm:$0xff]
    %v34 = vld [vmem:[%s0 + $0x18] sm:$0xff]
    %v35 = vld [vmem:[#allocation2] sm:$0xf]
    %v36 = vld [vmem:[%s3] sm:$0x1]
    %v37 = vlaneseq
    %v38 = vshrl.u32 %v37, 7
    %v39 = vsub.s32 0, %v38
    %v40 = vrot.slane %v36, %v39
    %vm41 = vcmask 31744
    %v43 = vsel %vm41, %v31, 0
    %v46 = vsel %vm41, %v32, 0
    %v49 = vsel %vm41, %v33, 0
    %v52 = vsel %vm41, %v34, 0
    %vm54 = vcmask 1043456
    %v56 = vsel %vm54, %v35, 0
    %58 = vmatprep.subr.mxu0 0.0
    %59 = vmatpush1.msra.mxu0 %v56
    %60 = vmatprep.subr.mxu0 0.0
    %61 = vmatpush1.msra.mxu0 0.0
    %62 = vmatprep.subr.mxu0 0.0
    %63 = vmatpush1.msra.mxu0 0.0
    %64 = vmatprep.subr.mxu0 0.0
    %65 = vmatpush1.msra.mxu0 0.0
    %66 = vmatprep.subr.mxu0 0.0
    %67 = vmatpush1.msra.mxu0 0.0
    %68 = vmatprep.subr.mxu0 0.0
    %69 = vmatpush1.msra.mxu0 0.0
    %70 = vmatprep.subr.mxu0 0.0
    %71 = vmatpush1.msra.mxu0 0.0
    %72 = vmatprep.subr.mxu0 0.0
    %73 = vmatpush1.msra.mxu0 0.0
    %74 = vmatprep.subr.mxu0 0.0
    %75 = vmatpush1.msra.mxu0 0.0
    %76 = vmatprep.subr.mxu0 0.0
    %77 = vmatpush1.msra.mxu0 0.0
    %78 = vmatprep.subr.mxu0 0.0
    %79 = vmatpush1.msra.mxu0 0.0
    %80 = vmatprep.subr.mxu0 0.0
    %81 = vmatpush1.msra.mxu0 0.0
    %82 = vmatprep.subr.mxu0 0.0
    %83 = vmatpush1.msra.mxu0 0.0
    %84 = vmatprep.subr.mxu0 0.0
    %85 = vmatpush1.msra.mxu0 0.0
    %86 = vmatprep.subr.mxu0 0.0
    %87 = vmatpush1.msra.mxu0 0.0
    %88 = vmatprep.subr.mxu0 0.0
    %89 = vmatpush1.msra.mxu0 0.0
    %90 = vmatprep.subr.mxu0 0.0
    %91 = vmatpush1.msra.mxu0 0.0
    %92 = vmatprep.subr.mxu0 0.0
    %93 = vmatpush1.msra.mxu0 0.0
    %94 = vmatprep.subr.mxu0 0.0
    %95 = vmatpush1.msra.mxu0 0.0
    %96 = vmatprep.subr.mxu0 0.0
    %97 = vmatpush1.msra.mxu0 0.0
    %98 = vmatprep.subr.mxu0 0.0
    %99 = vmatpush1.msra.mxu0 0.0
    %100 = vmatprep.subr.mxu0 0.0
    %101 = vmatpush1.msra.mxu0 0.0
    %102 = vmatprep.subr.mxu0 0.0
    %103 = vmatpush1.msra.mxu0 0.0
    %104 = vmatprep.subr.mxu0 0.0
    %105 = vmatpush1.msra.mxu0 0.0
    %106 = vmatprep.subr.mxu0 0.0
    %107 = vmatpush1.msra.mxu0 0.0
    %108 = vmatprep.subr.mxu0 0.0
    %109 = vmatpush1.msra.mxu0 0.0
    %110 = vmatprep.subr.mxu0 0.0
    %111 = vmatpush1.msra.mxu0 0.0
    %112 = vmatprep.subr.mxu0 0.0
    %113 = vmatpush1.msra.mxu0 0.0
    %114 = vmatprep.subr.mxu0 0.0
    %115 = vmatpush1.msra.mxu0 0.0
    %116 = vmatprep.subr.mxu0 0.0
    %117 = vmatpush1.msra.mxu0 0.0
    %118 = vmatprep.subr.mxu0 0.0
    %119 = vmatpush1.msra.mxu0 0.0
    %120 = vmatprep.subr.mxu0 0.0
    %121 = vmatpush1.msra.mxu0 0.0
    %122 = vmatprep.mubr.f32.mxu0 0.0
    %123 = vmatmul.mubr.f32.gmra.mrb[0].mxu0 %v43
    %v124 = vpop.f32.mrb[0].mxu0
    %v125 = vadd.f32 %v40, %v124
    %v126 = vpop.f32.mrb[0].mxu0
    %127 = vmatprep.mubr.f32.mxu0 0.0
    %128 = vmatmul.mubr.f32.gmra.mrb[0].mxu0 %v46
    %v129 = vpop.f32.mrb[0].mxu0
    %v130 = vadd.f32 %v40, %v129
    %v131 = vpop.f32.mrb[0].mxu0
    %132 = vmatprep.mubr.f32.mxu0 0.0
    %133 = vmatmul.mubr.f32.gmra.mrb[0].mxu0 %v49
    %v134 = vpop.f32.mrb[0].mxu0
    %v135 = vadd.f32 %v40, %v134
    %v136 = vpop.f32.mrb[0].mxu0
    %137 = vmatprep.mubr.f32.mxu0 0.0
    %138 = vmatmul.mubr.f32.gmra.mrb[0].mxu0 %v52
    %v139 = vpop.f32.mrb[0].mxu0
    %v140 = vadd.f32 %v40, %v139
    %v141 = vpop.f32.mrb[0].mxu0
    %142 = vdwg.mxu0
    %v143 = vtanh.pop %v125
    %v144 = vtanh.pop %v130
    %v145 = vtanh.pop %v135
    %v146 = vtanh.pop %v140
    %vm147 = vcmask 261120
    %v148 = vsel %vm147, %v143, 0.0
    %v149 = vsel %vm147, %v144, 0.0
    %v150 = vadd.f32 %v148, %v149
    %v151 = vsel %vm147, %v145, 0.0
    %v152 = vadd.f32 %v150, %v151
    %v153 = vsel %vm147, %v146, 0.0
    %v154 = vadd.f32 %v152, %v153
    %v155 = vrot.slane %v154, 4
    %v156 = vadd.f32 %v154, %v155
    %v157 = vrot.slane %v156, 2
    %v158 = vadd.f32 %v156, %v157
    %v159 = vrot.slane %v158, 1
    %v160 = vadd.f32 %v158, %v159
    %v161 = vmul.f32 %v160, 0.0625
    %s162 = scalar_lea.vmem [#allocation2], 48
    %v163 = vld [vmem:[%s162] sm:$0xff]
    %v164 = vld [vmem:[%s162 + $0x8] sm:$0xff]
    %v165 = vld [vmem:[%s162 + $0x10] sm:$0xff]
    %v166 = vld [vmem:[%s162 + $0x18] sm:$0xff]
    %v167 = vld [vmem:[%s3 + $0x1] sm:$0x1]
    %v168 = vmul.f32 %v167, 2.0
    %v170 = vsel %vm147, %v161, 0
    %172 = vmatprep.subr.mxu0 0.0
    %173 = vmatpush1.msra.mxu0 %v163
    %174 = vmatprep.subr.mxu0 0.0
    %175 = vmatpush1.msra.mxu0 %v164
    %176 = vmatprep.subr.mxu0 0.0
    %177 = vmatpush1.msra.mxu0 %v165
    %178 = vmatprep.subr.mxu0 0.0
    %179 = vmatpush1.msra.mxu0 %v166
    %180 = vmatprep.subr.mxu0 0.0
    %181 = vmatpush1.msra.mxu0 0.0
    %182 = vmatprep.subr.mxu0 0.0
    %183 = vmatpush1.msra.mxu0 0.0
    %184 = vmatprep.subr.mxu0 0.0
    %185 = vmatpush1.msra.mxu0 0.0
    %186 = vmatprep.subr.mxu0 0.0
    %187 = vmatpush1.msra.mxu0 0.0
    %188 = vmatprep.subr.mxu0 0.0
    %189 = vmatpush1.msra.mxu0 0.0
    %190 = vmatprep.subr.mxu0 0.0
    %191 = vmatpush1.msra.mxu0 0.0
    %192 = vmatprep.subr.mxu0 0.0
    %193 = vmatpush1.msra.mxu0 0.0
    %194 = vmatprep.subr.mxu0 0.0
    %195 = vmatpush1.msra.mxu0 0.0
    %196 = vmatprep.subr.mxu0 0.0
    %197 = vmatpush1.msra.mxu0 0.0
    %198 = vmatprep.subr.mxu0 0.0
    %199 = vmatpush1.msra.mxu0 0.0
    %200 = vmatprep.subr.mxu0 0.0
    %201 = vmatpush1.msra.mxu0 0.0
    %202 = vmatprep.subr.mxu0 0.0
    %203 = vmatpush1.msra.mxu0 0.0
    %204 = vmatprep.subr.mxu0 0.0
    %205 = vmatpush1.msra.mxu0 0.0
    %206 = vmatprep.subr.mxu0 0.0
    %207 = vmatpush1.msra.mxu0 0.0
    %208 = vmatprep.subr.mxu0 0.0
    %209 = vmatpush1.msra.mxu0 0.0
    %210 = vmatprep.subr.mxu0 0.0
    %211 = vmatpush1.msra.mxu0 0.0
    %212 = vmatprep.subr.mxu0 0.0
    %213 = vmatpush1.msra.mxu0 0.0
    %214 = vmatprep.subr.mxu0 0.0
    %215 = vmatpush1.msra.mxu0 0.0
    %216 = vmatprep.subr.mxu0 0.0
    %217 = vmatpush1.msra.mxu0 0.0
    %218 = vmatprep.subr.mxu0 0.0
    %219 = vmatpush1.msra.mxu0 0.0
    %220 = vmatprep.subr.mxu0 0.0
    %221 = vmatpush1.msra.mxu0 0.0
    %222 = vmatprep.subr.mxu0 0.0
    %223 = vmatpush1.msra.mxu0 0.0
    %224 = vmatprep.subr.mxu0 0.0
    %225 = vmatpush1.msra.mxu0 0.0
    %226 = vmatprep.subr.mxu0 0.0
    %227 = vmatpush1.msra.mxu0 0.0
    %228 = vmatprep.subr.mxu0 0.0
    %229 = vmatpush1.msra.mxu0 0.0
    %230 = vmatprep.subr.mxu0 0.0
    %231 = vmatpush1.msra.mxu0 0.0
    %232 = vmatprep.subr.mxu0 0.0
    %233 = vmatpush1.msra.mxu0 0.0
    %234 = vmatprep.subr.mxu0 0.0
    %235 = vmatpush1.msra.mxu0 0.0
    %236 = vmatprep.mubr.f32.mxu0 0.0
    %237 = vmatmul.mubr.f32.gmra.mrb[0].mxu0 %v170
    %v238 = vpop.f32.mrb[0].mxu0
    %v239 = vadd.f32 %v168, %v238
    %v240 = vpop.f32.mrb[0].mxu0
    %241 = vdwg.mxu0
    %v242 = vld [vmem:[%s1] sm:$0xff]
    %v243 = vld [vmem:[%s1 + $0x8] sm:$0xff]
    %s244 = scalar_lea.vmem [#allocation2], 96
    %v245 = vld [vmem:[%s244] sm:$0xf]
    %v246 = vld [vmem:[%s3 + $0x2] sm:$0x1]
    %v247 = vlaneseq
    %v248 = vshrl.u32 %v247, 7
    %v249 = vsub.s32 0, %v248
    %v250 = vrot.slane %v246, %v249
    %v252 = vsel %vm41, %v242, 0
    %v255 = vsel %vm41, %v243, 0
    %v258 = vsel %vm54, %v245, 0
    %260 = vmatprep.subr.mxu0 0.0
    %261 = vmatpush1.msra.mxu0 %v258
    %262 = vmatprep.subr.mxu0 0.0
    %263 = vmatpush1.msra.mxu0 0.0
    %264 = vmatprep.subr.mxu0 0.0
    %265 = vmatpush1.msra.mxu0 0.0
    %266 = vmatprep.subr.mxu0 0.0
    %267 = vmatpush1.msra.mxu0 0.0
    %268 = vmatprep.subr.mxu0 0.0
    %269 = vmatpush1.msra.mxu0 0.0
    %270 = vmatprep.subr.mxu0 0.0
    %271 = vmatpush1.msra.mxu0 0.0
    %272 = vmatprep.subr.mxu0 0.0
    %273 = vmatpush1.msra.mxu0 0.0
    %274 = vmatprep.subr.mxu0 0.0
    %275 = vmatpush1.msra.mxu0 0.0
    %276 = vmatprep.subr.mxu0 0.0
    %277 = vmatpush1.msra.mxu0 0.0
    %278 = vmatprep.subr.mxu0 0.0
    %279 = vmatpush1.msra.mxu0 0.0
    %280 = vmatprep.subr.mxu0 0.0
    %281 = vmatpush1.msra.mxu0 0.0
    %282 = vmatprep.subr.mxu0 0.0
    %283 = vmatpush1.msra.mxu0 0.0
    %284 = vmatprep.subr.mxu0 0.0
    %285 = vmatpush1.msra.mxu0 0.0
    %286 = vmatprep.subr.mxu0 0.0
    %287 = vmatpush1.msra.mxu0 0.0
    %288 = vmatprep.subr.mxu0 0.0
    %289 = vmatpush1.msra.mxu0 0.0
    %290 = vmatprep.subr.mxu0 0.0
    %291 = vmatpush1.msra.mxu0 0.0
    %292 = vmatprep.subr.mxu0 0.0
    %293 = vmatpush1.msra.mxu0 0.0
    %294 = vmatprep.subr.mxu0 0.0
    %295 = vmatpush1.msra.mxu0 0.0
    %296 = vmatprep.subr.mxu0 0.0
    %297 = vmatpush1.msra.mxu0 0.0
    %298 = vmatprep.subr.mxu0 0.0
    %299 = vmatpush1.msra.mxu0 0.0
    %300 = vmatprep.subr.mxu0 0.0
    %301 = vmatpush1.msra.mxu0 0.0
    %302 = vmatprep.subr.mxu0 0.0
    %303 = vmatpush1.msra.mxu0 0.0
    %304 = vmatprep.subr.mxu0 0.0
    %305 = vmatpush1.msra.mxu0 0.0
    %306 = vmatprep.subr.mxu0 0.0
    %307 = vmatpush1.msra.mxu0 0.0
    %308 = vmatprep.subr.mxu0 0.0
    %309 = vmatpush1.msra.mxu0 0.0
    %310 = vmatprep.subr.mxu0 0.0
    %311 = vmatpush1.msra.mxu0 0.0
    %312 = vmatprep.subr.mxu0 0.0
    %313 = vmatpush1.msra.mxu0 0.0
    %314 = vmatprep.subr.mxu0 0.0
    %315 = vmatpush1.msra.mxu0 0.0
    %316 = vmatprep.subr.mxu0 0.0
    %317 = vmatpush1.msra.mxu0 0.0
    %318 = vmatprep.subr.mxu0 0.0
    %319 = vmatpush1.msra.mxu0 0.0
    %320 = vmatprep.subr.mxu0 0.0
    %321 = vmatpush1.msra.mxu0 0.0
    %322 = vmatprep.subr.mxu0 0.0
    %323 = vmatpush1.msra.mxu0 0.0
    %324 = vmatprep.mubr.f32.mxu0 0.0
    %325 = vmatmul.mubr.f32.gmra.mrb[0].mxu0 %v252
    %v326 = vpop.f32.mrb[0].mxu0
    %v327 = vadd.f32 %v250, %v326
    %v328 = vpop.f32.mrb[0].mxu0
    %329 = vmatprep.mubr.f32.mxu0 0.0
    %330 = vmatmul.mubr.f32.gmra.mrb[0].mxu0 %v255
    %v331 = vpop.f32.mrb[0].mxu0
    %v332 = vadd.f32 %v250, %v331
    %v333 = vpop.f32.mrb[0].mxu0
    %334 = vdwg.mxu0
    %s335 = scalar_lea.vmem [#allocation2], 144
    %v336 = vld [vmem:[%s335] sm:$0xff]
    %v337 = vld [vmem:[%s335 + $0x8] sm:$0xff]
    %v338 = vld [vmem:[%s335 + $0x10] sm:$0xff]
    %v339 = vld [vmem:[%s335 + $0x18] sm:$0xff]
    %v340 = vld [vmem:[%s3 + $0x3] sm:$0x1]
    %v341 = vlaneseq
    %v342 = vshrl.u32 %v341, 7
    %v343 = vsub.s32 0, %v342
    %v344 = vrot.slane %v340, %v343
    %v345 = vlaneseq
    %v346 = vshrl.u32 %v345, 7
    %v347 = vsub.s32 0, %v346
    %v348 = vrot.slane %v239, %v347
    %v350 = vsel %vm147, %v348, 0
    %352 = vmatprep.subr.mxu0 0.0
    %353 = vmatpush1.msra.mxu0 %v336
    %354 = vmatprep.subr.mxu0 0.0
    %355 = vmatpush1.msra.mxu0 %v337
    %356 = vmatprep.subr.mxu0 0.0
    %357 = vmatpush1.msra.mxu0 %v338
    %358 = vmatprep.subr.mxu0 0.0
    %359 = vmatpush1.msra.mxu0 %v339
    %360 = vmatprep.subr.mxu0 0.0
    %361 = vmatpush1.msra.mxu0 0.0
    %362 = vmatprep.subr.mxu0 0.0
    %363 = vmatpush1.msra.mxu0 0.0
    %364 = vmatprep.subr.mxu0 0.0
    %365 = vmatpush1.msra.mxu0 0.0
    %366 = vmatprep.subr.mxu0 0.0
    %367 = vmatpush1.msra.mxu0 0.0
    %368 = vmatprep.subr.mxu0 0.0
    %369 = vmatpush1.msra.mxu0 0.0
    %370 = vmatprep.subr.mxu0 0.0
    %371 = vmatpush1.msra.mxu0 0.0
    %372 = vmatprep.subr.mxu0 0.0
    %373 = vmatpush1.msra.mxu0 0.0
    %374 = vmatprep.subr.mxu0 0.0
    %375 = vmatpush1.msra.mxu0 0.0
    %376 = vmatprep.subr.mxu0 0.0
    %377 = vmatpush1.msra.mxu0 0.0
    %378 = vmatprep.subr.mxu0 0.0
    %379 = vmatpush1.msra.mxu0 0.0
    %380 = vmatprep.subr.mxu0 0.0
    %381 = vmatpush1.msra.mxu0 0.0
    %382 = vmatprep.subr.mxu0 0.0
    %383 = vmatpush1.msra.mxu0 0.0
    %384 = vmatprep.subr.mxu0 0.0
    %385 = vmatpush1.msra.mxu0 0.0
    %386 = vmatprep.subr.mxu0 0.0
    %387 = vmatpush1.msra.mxu0 0.0
    %388 = vmatprep.subr.mxu0 0.0
    %389 = vmatpush1.msra.mxu0 0.0
    %390 = vmatprep.subr.mxu0 0.0
    %391 = vmatpush1.msra.mxu0 0.0
    %392 = vmatprep.subr.mxu0 0.0
    %393 = vmatpush1.msra.mxu0 0.0
    %394 = vmatprep.subr.mxu0 0.0
    %395 = vmatpush1.msra.mxu0 0.0
    %396 = vmatprep.subr.mxu0 0.0
    %397 = vmatpush1.msra.mxu0 0.0
    %398 = vmatprep.subr.mxu0 0.0
    %399 = vmatpush1.msra.mxu0 0.0
    %400 = vmatprep.subr.mxu0 0.0
    %401 = vmatpush1.msra.mxu0 0.0
    %402 = vmatprep.subr.mxu0 0.0
    %403 = vmatpush1.msra.mxu0 0.0
    %404 = vmatprep.subr.mxu0 0.0
    %405 = vmatpush1.msra.mxu0 0.0
    %406 = vmatprep.subr.mxu0 0.0
    %407 = vmatpush1.msra.mxu0 0.0
    %408 = vmatprep.subr.mxu0 0.0
    %409 = vmatpush1.msra.mxu0 0.0
    %410 = vmatprep.subr.mxu0 0.0
    %411 = vmatpush1.msra.mxu0 0.0
    %412 = vmatprep.subr.mxu0 0.0
    %413 = vmatpush1.msra.mxu0 0.0
    %414 = vmatprep.subr.mxu0 0.0
    %415 = vmatpush1.msra.mxu0 0.0
    %416 = vmatprep.mubr.f32.mxu0 0.0
    %417 = vmatmul.mubr.f32.gmra.mrb[0].mxu0 %v350
    %v418 = vpop.f32.mrb[0].mxu0
    %v419 = vadd.f32 0.0, %v418
    %v420 = vpop.f32.mrb[0].mxu0
    %421 = vdwg.mxu0
    %v422 = vadd.f32 %v327, %v419
    %v423 = vxor.u32 %v422, 2147483648
    %v424 = vmul.f32 %v423, 1.442695
    %v425 = vpow.pop %v424
    %v426 = vadd.f32 %v425, 1.0
    %v427 = vrcp.pop %v426
    %v428 = vmul.f32 1.0, %v427
    %430 = vrot.lane.b32.xlu0 %v344, 64
    %v431 = vpop.permute.xlu0 %430
    %v433 = vadd.f32 %v419, %v431
    %435 = vrot.lane.b32.xlu0 %v433, 64
    %v436 = vpop.permute.xlu0 %435
    %v438 = vmul.f32 %v428, %v436
    %440 = vrot.lane.b32.xlu0 %v438, 64
    %v441 = vpop.permute.xlu0 %440
    %v443 = vadd.f32 %v327, %v441
    %v444 = vtanh.pop %v443
    %v445 = vsub.f32 1.0, %v428
    %447 = vrot.lane.b32.xlu0 %v444, 96
    %v448 = vpop.permute.xlu0 %447
    %v450 = vmul.f32 %v445, %v448
    %451 = vrot.lane.b32.xlu0 %v348, 32
    %v452 = vpop.permute.xlu0 %451
    %v454 = vmul.f32 %v428, %v452
    %v455 = vadd.f32 %v450, %v454
    %457 = vrot.lane.b32.xlu0 %v455, 96
    %v458 = vpop.permute.xlu0 %457
    %v459 = vsel %vm147, %v458, 0
    %461 = vmatprep.subr.mxu0 0.0
    %462 = vmatpush1.msra.mxu0 %v336
    %463 = vmatprep.subr.mxu0 0.0
    %464 = vmatpush1.msra.mxu0 %v337
    %465 = vmatprep.subr.mxu0 0.0
    %466 = vmatpush1.msra.mxu0 %v338
    %467 = vmatprep.subr.mxu0 0.0
    %468 = vmatpush1.msra.mxu0 %v339
    %469 = vmatprep.subr.mxu0 0.0
    %470 = vmatpush1.msra.mxu0 0.0
    %471 = vmatprep.subr.mxu0 0.0
    %472 = vmatpush1.msra.mxu0 0.0
    %473 = vmatprep.subr.mxu0 0.0
    %474 = vmatpush1.msra.mxu0 0.0
    %475 = vmatprep.subr.mxu0 0.0
    %476 = vmatpush1.msra.mxu0 0.0
    %477 = vmatprep.subr.mxu0 0.0
    %478 = vmatpush1.msra.mxu0 0.0
    %479 = vmatprep.subr.mxu0 0.0
    %480 = vmatpush1.msra.mxu0 0.0
    %481 = vmatprep.subr.mxu0 0.0
    %482 = vmatpush1.msra.mxu0 0.0
    %483 = vmatprep.subr.mxu0 0.0
    %484 = vmatpush1.msra.mxu0 0.0
    %485 = vmatprep.subr.mxu0 0.0
    %486 = vmatpush1.msra.mxu0 0.0
    %487 = vmatprep.subr.mxu0 0.0
    %488 = vmatpush1.msra.mxu0 0.0
    %489 = vmatprep.subr.mxu0 0.0
    %490 = vmatpush1.msra.mxu0 0.0
    %491 = vmatprep.subr.mxu0 0.0
    %492 = vmatpush1.msra.mxu0 0.0
    %493 = vmatprep.subr.mxu0 0.0
    %494 = vmatpush1.msra.mxu0 0.0
    %495 = vmatprep.subr.mxu0 0.0
    %496 = vmatpush1.msra.mxu0 0.0
    %497 = vmatprep.subr.mxu0 0.0
    %498 = vmatpush1.msra.mxu0 0.0
    %499 = vmatprep.subr.mxu0 0.0
    %500 = vmatpush1.msra.mxu0 0.0
    %501 = vmatprep.subr.mxu0 0.0
    %502 = vmatpush1.msra.mxu0 0.0
    %503 = vmatprep.subr.mxu0 0.0
    %504 = vmatpush1.msra.mxu0 0.0
    %505 = vmatprep.subr.mxu0 0.0
    %506 = vmatpush1.msra.mxu0 0.0
    %507 = vmatprep.subr.mxu0 0.0
    %508 = vmatpush1.msra.mxu0 0.0
    %509 = vmatprep.subr.mxu0 0.0
    %510 = vmatpush1.msra.mxu0 0.0
    %511 = vmatprep.subr.mxu0 0.0
    %512 = vmatpush1.msra.mxu0 0.0
    %513 = vmatprep.subr.mxu0 0.0
    %514 = vmatpush1.msra.mxu0 0.0
    %515 = vmatprep.subr.mxu0 0.0
    %516 = vmatpush1.msra.mxu0 0.0
    %517 = vmatprep.subr.mxu0 0.0
    %518 = vmatpush1.msra.mxu0 0.0
    %519 = vmatprep.subr.mxu0 0.0
    %520 = vmatpush1.msra.mxu0 0.0
    %521 = vmatprep.subr.mxu0 0.0
    %522 = vmatpush1.msra.mxu0 0.0
    %523 = vmatprep.subr.mxu0 0.0
    %524 = vmatpush1.msra.mxu0 0.0
    %525 = vmatprep.mubr.f32.mxu0 0.0
    %526 = vmatmul.mubr.f32.gmra.mrb[0].mxu0 %v459
    %v527 = vpop.f32.mrb[0].mxu0
    %v528 = vadd.f32 0.0, %v527
    %v529 = vpop.f32.mrb[0].mxu0
    %530 = vdwg.mxu0
    %v532 = vrot.slane %v528, 6
    %v534 = vadd.f32 %v327, %v532
    %v535 = vxor.u32 %v534, 2147483648
    %v536 = vmul.f32 %v535, 1.442695
    %v537 = vpow.pop %v536
    %v538 = vadd.f32 %v537, 1.0
    %v539 = vrcp.pop %v538
    %v540 = vmul.f32 1.0, %v539
    %v541 = vadd.f32 %v528, %v431
    %v543 = vrot.slane %v541, 6
    %544 = vrot.lane.b32.xlu0 %v543, 64
    %v545 = vpop.permute.xlu0 %544
    %v547 = vmul.f32 %v540, %v545
    %549 = vrot.lane.b32.xlu0 %v547, 64
    %v550 = vpop.permute.xlu0 %549
    %v552 = vadd.f32 %v327, %v550
    %v553 = vtanh.pop %v552
    %v554 = vsub.f32 1.0, %v540
    %556 = vrot.lane.b32.xlu0 %v553, 96
    %v557 = vpop.permute.xlu0 %556
    %v559 = vmul.f32 %v554, %v557
    %v560 = vrot.slane %v455, 6
    %v562 = vmul.f32 %v540, %v560
    %v563 = vadd.f32 %v559, %v562
    %v565 = vrot.slane %v563, 2
    %566 = vrot.lane.b32.xlu0 %v565, 96
    %v567 = vpop.permute.xlu0 %566
    %v568 = vsel %vm147, %v567, 0
    %570 = vmatprep.subr.mxu0 0.0
    %571 = vmatpush1.msra.mxu0 %v336
    %572 = vmatprep.subr.mxu0 0.0
    %573 = vmatpush1.msra.mxu0 %v337
    %574 = vmatprep.subr.mxu0 0.0
    %575 = vmatpush1.msra.mxu0 %v338
    %576 = vmatprep.subr.mxu0 0.0
    %577 = vmatpush1.msra.mxu0 %v339
    %578 = vmatprep.subr.mxu0 0.0
    %579 = vmatpush1.msra.mxu0 0.0
    %580 = vmatprep.subr.mxu0 0.0
    %581 = vmatpush1.msra.mxu0 0.0
    %582 = vmatprep.subr.mxu0 0.0
    %583 = vmatpush1.msra.mxu0 0.0
    %584 = vmatprep.subr.mxu0 0.0
    %585 = vmatpush1.msra.mxu0 0.0
    %586 = vmatprep.subr.mxu0 0.0
    %587 = vmatpush1.msra.mxu0 0.0
    %588 = vmatprep.subr.mxu0 0.0
    %589 = vmatpush1.msra.mxu0 0.0
    %590 = vmatprep.subr.mxu0 0.0
    %591 = vmatpush1.msra.mxu0 0.0
    %592 = vmatprep.subr.mxu0 0.0
    %593 = vmatpush1.msra.mxu0 0.0
    %594 = vmatprep.subr.mxu0 0.0
    %595 = vmatpush1.msra.mxu0 0.0
    %596 = vmatprep.subr.mxu0 0.0
    %597 = vmatpush1.msra.mxu0 0.0
    %598 = vmatprep.subr.mxu0 0.0
    %599 = vmatpush1.msra.mxu0 0.0
    %600 = vmatprep.subr.mxu0 0.0
    %601 = vmatpush1.msra.mxu0 0.0
    %602 = vmatprep.subr.mxu0 0.0
    %603 = vmatpush1.msra.mxu0 0.0
    %604 = vmatprep.subr.mxu0 0.0
    %605 = vmatpush1.msra.mxu0 0.0
    %606 = vmatprep.subr.mxu0 0.0
    %607 = vmatpush1.msra.mxu0 0.0
    %608 = vmatprep.subr.mxu0 0.0
    %609 = vmatpush1.msra.mxu0 0.0
    %610 = vmatprep.subr.mxu0 0.0
    %611 = vmatpush1.msra.mxu0 0.0
    %612 = vmatprep.subr.mxu0 0.0
    %613 = vmatpush1.msra.mxu0 0.0
    %614 = vmatprep.subr.mxu0 0.0
    %615 = vmatpush1.msra.mxu0 0.0
    %616 = vmatprep.subr.mxu0 0.0
    %617 = vmatpush1.msra.mxu0 0.0
    %618 = vmatprep.subr.mxu0 0.0
    %619 = vmatpush1.msra.mxu0 0.0
    %620 = vmatprep.subr.mxu0 0.0
    %621 = vmatpush1.msra.mxu0 0.0
    %622 = vmatprep.subr.mxu0 0.0
    %623 = vmatpush1.msra.mxu0 0.0
    %624 = vmatprep.subr.mxu0 0.0
    %625 = vmatpush1.msra.mxu0 0.0
    %626 = vmatprep.subr.mxu0 0.0
    %627 = vmatpush1.msra.mxu0 0.0
    %628 = vmatprep.subr.mxu0 0.0
    %629 = vmatpush1.msra.mxu0 0.0
    %630 = vmatprep.subr.mxu0 0.0
    %631 = vmatpush1.msra.mxu0 0.0
    %632 = vmatprep.subr.mxu0 0.0
    %633 = vmatpush1.msra.mxu0 0.0
    %634 = vmatprep.mubr.f32.mxu0 0.0
    %635 = vmatmul.mubr.f32.gmra.mrb[0].mxu0 %v568
    %v636 = vpop.f32.mrb[0].mxu0
    %v637 = vadd.f32 0.0, %v636
    %v638 = vpop.f32.mrb[0].mxu0
    %639 = vdwg.mxu0
    %v641 = vrot.slane %v637, 4
    %v643 = vadd.f32 %v327, %v641
    %v644 = vxor.u32 %v643, 2147483648
    %v645 = vmul.f32 %v644, 1.442695
    %v646 = vpow.pop %v645
    %v647 = vadd.f32 %v646, 1.0
    %v648 = vrcp.pop %v647
    %v649 = vmul.f32 1.0, %v648
    %v650 = vadd.f32 %v637, %v431
    %v652 = vrot.slane %v650, 4
    %653 = vrot.lane.b32.xlu0 %v652, 64
    %v654 = vpop.permute.xlu0 %653
    %v656 = vmul.f32 %v649, %v654
    %658 = vrot.lane.b32.xlu0 %v656, 64
    %v659 = vpop.permute.xlu0 %658
    %v661 = vadd.f32 %v327, %v659
    %v662 = vtanh.pop %v661
    %v663 = vsub.f32 1.0, %v649
    %665 = vrot.lane.b32.xlu0 %v662, 96
    %v666 = vpop.permute.xlu0 %665
    %v668 = vmul.f32 %v663, %v666
    %v669 = vrot.slane %v563, 6
    %v671 = vmul.f32 %v649, %v669
    %v672 = vadd.f32 %v668, %v671
    %v674 = vrot.slane %v672, 4
    %675 = vrot.lane.b32.xlu0 %v674, 96
    %v676 = vpop.permute.xlu0 %675
    %v677 = vsel %vm147, %v676, 0
    %679 = vmatprep.subr.mxu0 0.0
    %680 = vmatpush1.msra.mxu0 %v336
    %681 = vmatprep.subr.mxu0 0.0
    %682 = vmatpush1.msra.mxu0 %v337
    %683 = vmatprep.subr.mxu0 0.0
    %684 = vmatpush1.msra.mxu0 %v338
    %685 = vmatprep.subr.mxu0 0.0
    %686 = vmatpush1.msra.mxu0 %v339
    %687 = vmatprep.subr.mxu0 0.0
    %688 = vmatpush1.msra.mxu0 0.0
    %689 = vmatprep.subr.mxu0 0.0
    %690 = vmatpush1.msra.mxu0 0.0
    %691 = vmatprep.subr.mxu0 0.0
    %692 = vmatpush1.msra.mxu0 0.0
    %693 = vmatprep.subr.mxu0 0.0
    %694 = vmatpush1.msra.mxu0 0.0
    %695 = vmatprep.subr.mxu0 0.0
    %696 = vmatpush1.msra.mxu0 0.0
    %697 = vmatprep.subr.mxu0 0.0
    %698 = vmatpush1.msra.mxu0 0.0
    %699 = vmatprep.subr.mxu0 0.0
    %700 = vmatpush1.msra.mxu0 0.0
    %701 = vmatprep.subr.mxu0 0.0
    %702 = vmatpush1.msra.mxu0 0.0
    %703 = vmatprep.subr.mxu0 0.0
    %704 = vmatpush1.msra.mxu0 0.0
    %705 = vmatprep.subr.mxu0 0.0
    %706 = vmatpush1.msra.mxu0 0.0
    %707 = vmatprep.subr.mxu0 0.0
    %708 = vmatpush1.msra.mxu0 0.0
    %709 = vmatprep.subr.mxu0 0.0
    %710 = vmatpush1.msra.mxu0 0.0
    %711 = vmatprep.subr.mxu0 0.0
    %712 = vmatpush1.msra.mxu0 0.0
    %713 = vmatprep.subr.mxu0 0.0
    %714 = vmatpush1.msra.mxu0 0.0
    %715 = vmatprep.subr.mxu0 0.0
    %716 = vmatpush1.msra.mxu0 0.0
    %717 = vmatprep.subr.mxu0 0.0
    %718 = vmatpush1.msra.mxu0 0.0
    %719 = vmatprep.subr.mxu0 0.0
    %720 = vmatpush1.msra.mxu0 0.0
    %721 = vmatprep.subr.mxu0 0.0
    %722 = vmatpush1.msra.mxu0 0.0
    %723 = vmatprep.subr.mxu0 0.0
    %724 = vmatpush1.msra.mxu0 0.0
    %725 = vmatprep.subr.mxu0 0.0
    %726 = vmatpush1.msra.mxu0 0.0
    %727 = vmatprep.subr.mxu0 0.0
    %728 = vmatpush1.msra.mxu0 0.0
    %729 = vmatprep.subr.mxu0 0.0
    %730 = vmatpush1.msra.mxu0 0.0
    %731 = vmatprep.subr.mxu0 0.0
    %732 = vmatpush1.msra.mxu0 0.0
    %733 = vmatprep.subr.mxu0 0.0
    %734 = vmatpush1.msra.mxu0 0.0
    %735 = vmatprep.subr.mxu0 0.0
    %736 = vmatpush1.msra.mxu0 0.0
    %737 = vmatprep.subr.mxu0 0.0
    %738 = vmatpush1.msra.mxu0 0.0
    %739 = vmatprep.subr.mxu0 0.0
    %740 = vmatpush1.msra.mxu0 0.0
    %741 = vmatprep.subr.mxu0 0.0
    %742 = vmatpush1.msra.mxu0 0.0
    %743 = vmatprep.mubr.f32.mxu0 0.0
    %744 = vmatmul.mubr.f32.gmra.mrb[0].mxu0 %v677
    %v745 = vpop.f32.mrb[0].mxu0
    %v746 = vadd.f32 0.0, %v745
    %v747 = vpop.f32.mrb[0].mxu0
    %748 = vdwg.mxu0
    %v750 = vrot.slane %v746, 2
    %v752 = vadd.f32 %v327, %v750
    %v753 = vxor.u32 %v752, 2147483648
    %v754 = vmul.f32 %v753, 1.442695
    %v755 = vpow.pop %v754
    %v756 = vadd.f32 %v755, 1.0
    %v757 = vrcp.pop %v756
    %v758 = vmul.f32 1.0, %v757
    %v759 = vadd.f32 %v746, %v431
    %v761 = vrot.slane %v759, 2
    %762 = vrot.lane.b32.xlu0 %v761, 64
    %v763 = vpop.permute.xlu0 %762
    %v765 = vmul.f32 %v758, %v763
    %767 = vrot.lane.b32.xlu0 %v765, 64
    %v768 = vpop.permute.xlu0 %767
    %v770 = vadd.f32 %v327, %v768
    %v771 = vtanh.pop %v770
    %v772 = vsub.f32 1.0, %v758
    %774 = vrot.lane.b32.xlu0 %v771, 96
    %v775 = vpop.permute.xlu0 %774
    %v777 = vmul.f32 %v772, %v775
    %v778 = vrot.slane %v672, 6
    %v780 = vmul.f32 %v758, %v778
    %v781 = vadd.f32 %v777, %v780
    %v783 = vrot.slane %v781, 6
    %784 = vrot.lane.b32.xlu0 %v783, 96
    %v785 = vpop.permute.xlu0 %784
    %v786 = vsel %vm147, %v785, 0
    %788 = vmatprep.subr.mxu0 0.0
    %789 = vmatpush1.msra.mxu0 %v336
    %790 = vmatprep.subr.mxu0 0.0
    %791 = vmatpush1.msra.mxu0 %v337
    %792 = vmatprep.subr.mxu0 0.0
    %793 = vmatpush1.msra.mxu0 %v338
    %794 = vmatprep.subr.mxu0 0.0
    %795 = vmatpush1.msra.mxu0 %v339
    %796 = vmatprep.subr.mxu0 0.0
    %797 = vmatpush1.msra.mxu0 0.0
    %798 = vmatprep.subr.mxu0 0.0
    %799 = vmatpush1.msra.mxu0 0.0
    %800 = vmatprep.subr.mxu0 0.0
    %801 = vmatpush1.msra.mxu0 0.0
    %802 = vmatprep.subr.mxu0 0.0
    %803 = vmatpush1.msra.mxu0 0.0
    %804 = vmatprep.subr.mxu0 0.0
    %805 = vmatpush1.msra.mxu0 0.0
    %806 = vmatprep.subr.mxu0 0.0
    %807 = vmatpush1.msra.mxu0 0.0
    %808 = vmatprep.subr.mxu0 0.0
    %809 = vmatpush1.msra.mxu0 0.0
    %810 = vmatprep.subr.mxu0 0.0
    %811 = vmatpush1.msra.mxu0 0.0
    %812 = vmatprep.subr.mxu0 0.0
    %813 = vmatpush1.msra.mxu0 0.0
    %814 = vmatprep.subr.mxu0 0.0
    %815 = vmatpush1.msra.mxu0 0.0
    %816 = vmatprep.subr.mxu0 0.0
    %817 = vmatpush1.msra.mxu0 0.0
    %818 = vmatprep.subr.mxu0 0.0
    %819 = vmatpush1.msra.mxu0 0.0
    %820 = vmatprep.subr.mxu0 0.0
    %821 = vmatpush1.msra.mxu0 0.0
    %822 = vmatprep.subr.mxu0 0.0
    %823 = vmatpush1.msra.mxu0 0.0
    %824 = vmatprep.subr.mxu0 0.0
    %825 = vmatpush1.msra.mxu0 0.0
    %826 = vmatprep.subr.mxu0 0.0
    %827 = vmatpush1.msra.mxu0 0.0
    %828 = vmatprep.subr.mxu0 0.0
    %829 = vmatpush1.msra.mxu0 0.0
    %830 = vmatprep.subr.mxu0 0.0
    %831 = vmatpush1.msra.mxu0 0.0
    %832 = vmatprep.subr.mxu0 0.0
    %833 = vmatpush1.msra.mxu0 0.0
    %834 = vmatprep.subr.mxu0 0.0
    %835 = vmatpush1.msra.mxu0 0.0
    %836 = vmatprep.subr.mxu0 0.0
    %837 = vmatpush1.msra.mxu0 0.0
    %838 = vmatprep.subr.mxu0 0.0
    %839 = vmatpush1.msra.mxu0 0.0
    %840 = vmatprep.subr.mxu0 0.0
    %841 = vmatpush1.msra.mxu0 0.0
    %842 = vmatprep.subr.mxu0 0.0
    %843 = vmatpush1.msra.mxu0 0.0
    %844 = vmatprep.subr.mxu0 0.0
    %845 = vmatpush1.msra.mxu0 0.0
    %846 = vmatprep.subr.mxu0 0.0
    %847 = vmatpush1.msra.mxu0 0.0
    %848 = vmatprep.subr.mxu0 0.0
    %849 = vmatpush1.msra.mxu0 0.0
    %850 = vmatprep.subr.mxu0 0.0
    %851 = vmatpush1.msra.mxu0 0.0
    %852 = vmatprep.mubr.f32.mxu0 0.0
    %853 = vmatmul.mubr.f32.gmra.mrb[0].mxu0 %v786
    %v854 = vpop.f32.mrb[0].mxu0
    %v855 = vadd.f32 0.0, %v854
    %v856 = vpop.f32.mrb[0].mxu0
    %857 = vdwg.mxu0
    %v858 = vadd.f32 %v332, %v855
    %v859 = vxor.u32 %v858, 2147483648
    %v860 = vmul.f32 %v859, 1.442695
    %v861 = vpow.pop %v860
    %v862 = vadd.f32 %v861, 1.0
    %v863 = vrcp.pop %v862
    %v864 = vmul.f32 1.0, %v863
    %v865 = vadd.f32 %v855, %v431
    %867 = vrot.lane.b32.xlu0 %v865, 64
    %v868 = vpop.permute.xlu0 %867
    %v870 = vmul.f32 %v864, %v868
    %872 = vrot.lane.b32.xlu0 %v870, 64
    %v873 = vpop.permute.xlu0 %872
    %v875 = vadd.f32 %v332, %v873
    %v876 = vtanh.pop %v875
    %v877 = vsub.f32 1.0, %v864
    %879 = vrot.lane.b32.xlu0 %v876, 96
    %v880 = vpop.permute.xlu0 %879
    %v882 = vmul.f32 %v877, %v880
    %v884 = vmul.f32 %v864, %v783
    %v885 = vadd.f32 %v882, %v884
    %887 = vrot.lane.b32.xlu0 %v885, 96
    %v888 = vpop.permute.xlu0 %887
    %v889 = vsel %vm147, %v888, 0
    %891 = vmatprep.subr.mxu0 0.0
    %892 = vmatpush1.msra.mxu0 %v336
    %893 = vmatprep.subr.mxu0 0.0
    %894 = vmatpush1.msra.mxu0 %v337
    %895 = vmatprep.subr.mxu0 0.0
    %896 = vmatpush1.msra.mxu0 %v338
    %897 = vmatprep.subr.mxu0 0.0
    %898 = vmatpush1.msra.mxu0 %v339
    %899 = vmatprep.subr.mxu0 0.0
    %900 = vmatpush1.msra.mxu0 0.0
    %901 = vmatprep.subr.mxu0 0.0
    %902 = vmatpush1.msra.mxu0 0.0
    %903 = vmatprep.subr.mxu0 0.0
    %904 = vmatpush1.msra.mxu0 0.0
    %905 = vmatprep.subr.mxu0 0.0
    %906 = vmatpush1.msra.mxu0 0.0
    %907 = vmatprep.subr.mxu0 0.0
    %908 = vmatpush1.msra.mxu0 0.0
    %909 = vmatprep.subr.mxu0 0.0
    %910 = vmatpush1.msra.mxu0 0.0
    %911 = vmatprep.subr.mxu0 0.0
    %912 = vmatpush1.msra.mxu0 0.0
    %913 = vmatprep.subr.mxu0 0.0
    %914 = vmatpush1.msra.mxu0 0.0
    %915 = vmatprep.subr.mxu0 0.0
    %916 = vmatpush1.msra.mxu0 0.0
    %917 = vmatprep.subr.mxu0 0.0
    %918 = vmatpush1.msra.mxu0 0.0
    %919 = vmatprep.subr.mxu0 0.0
    %920 = vmatpush1.msra.mxu0 0.0
    %921 = vmatprep.subr.mxu0 0.0
    %922 = vmatpush1.msra.mxu0 0.0
    %923 = vmatprep.subr.mxu0 0.0
    %924 = vmatpush1.msra.mxu0 0.0
    %925 = vmatprep.subr.mxu0 0.0
    %926 = vmatpush1.msra.mxu0 0.0
    %927 = vmatprep.subr.mxu0 0.0
    %928 = vmatpush1.msra.mxu0 0.0
    %929 = vmatprep.subr.mxu0 0.0
    %930 = vmatpush1.msra.mxu0 0.0
    %931 = vmatprep.subr.mxu0 0.0
    %932 = vmatpush1.msra.mxu0 0.0
    %933 = vmatprep.subr.mxu0 0.0
    %934 = vmatpush1.msra.mxu0 0.0
    %935 = vmatprep.subr.mxu0 0.0
    %936 = vmatpush1.msra.mxu0 0.0
    %937 = vmatprep.subr.mxu0 0.0
    %938 = vmatpush1.msra.mxu0 0.0
    %939 = vmatprep.subr.mxu0 0.0
    %940 = vmatpush1.msra.mxu0 0.0
    %941 = vmatprep.subr.mxu0 0.0
    %942 = vmatpush1.msra.mxu0 0.0
    %943 = vmatprep.subr.mxu0 0.0
    %944 = vmatpush1.msra.mxu0 0.0
    %945 = vmatprep.subr.mxu0 0.0
    %946 = vmatpush1.msra.mxu0 0.0
    %947 = vmatprep.subr.mxu0 0.0
    %948 = vmatpush1.msra.mxu0 0.0
    %949 = vmatprep.subr.mxu0 0.0
    %950 = vmatpush1.msra.mxu0 0.0
    %951 = vmatprep.subr.mxu0 0.0
    %952 = vmatpush1.msra.mxu0 0.0
    %953 = vmatprep.subr.mxu0 0.0
    %954 = vmatpush1.msra.mxu0 0.0
    %955 = vmatprep.mubr.f32.mxu0 0.0
    %956 = vmatmul.mubr.f32.gmra.mrb[0].mxu0 %v889
    %v957 = vpop.f32.mrb[0].mxu0
    %v958 = vadd.f32 0.0, %v957
    %v959 = vpop.f32.mrb[0].mxu0
    %960 = vdwg.mxu0
    %v962 = vrot.slane %v958, 6
    %v964 = vadd.f32 %v332, %v962
    %v965 = vxor.u32 %v964, 2147483648
    %v966 = vmul.f32 %v965, 1.442695
    %v967 = vpow.pop %v966
    %v968 = vadd.f32 %v967, 1.0
    %v969 = vrcp.pop %v968
    %v970 = vmul.f32 1.0, %v969
    %v971 = vadd.f32 %v958, %v431
    %v973 = vrot.slane %v971, 6
    %974 = vrot.lane.b32.xlu0 %v973, 64
    %v975 = vpop.permute.xlu0 %974
    %v977 = vmul.f32 %v970, %v975
    %979 = vrot.lane.b32.xlu0 %v977, 64
    %v980 = vpop.permute.xlu0 %979
    %v982 = vadd.f32 %v332, %v980
    %v983 = vtanh.pop %v982
    %v984 = vsub.f32 1.0, %v970
    %986 = vrot.lane.b32.xlu0 %v983, 96
    %v987 = vpop.permute.xlu0 %986
    %v989 = vmul.f32 %v984, %v987
    %v990 = vrot.slane %v885, 6
    %v992 = vmul.f32 %v970, %v990
    %v993 = vadd.f32 %v989, %v992
    %v995 = vrot.slane %v993, 2
    %996 = vrot.lane.b32.xlu0 %v995, 96
    %v997 = vpop.permute.xlu0 %996
    %v998 = vsel %vm147, %v997, 0
    %1000 = vmatprep.subr.mxu0 0.0
    %1001 = vmatpush1.msra.mxu0 %v336
    %1002 = vmatprep.subr.mxu0 0.0
    %1003 = vmatpush1.msra.mxu0 %v337
    %1004 = vmatprep.subr.mxu0 0.0
    %1005 = vmatpush1.msra.mxu0 %v338
    %1006 = vmatprep.subr.mxu0 0.0
    %1007 = vmatpush1.msra.mxu0 %v339
    %1008 = vmatprep.subr.mxu0 0.0
    %1009 = vmatpush1.msra.mxu0 0.0
    %1010 = vmatprep.subr.mxu0 0.0
    %1011 = vmatpush1.msra.mxu0 0.0
    %1012 = vmatprep.subr.mxu0 0.0
    %1013 = vmatpush1.msra.mxu0 0.0
    %1014 = vmatprep.subr.mxu0 0.0
    %1015 = vmatpush1.msra.mxu0 0.0
    %1016 = vmatprep.subr.mxu0 0.0
    %1017 = vmatpush1.msra.mxu0 0.0
    %1018 = vmatprep.subr.mxu0 0.0
    %1019 = vmatpush1.msra.mxu0 0.0
    %1020 = vmatprep.subr.mxu0 0.0
    %1021 = vmatpush1.msra.mxu0 0.0
    %1022 = vmatprep.subr.mxu0 0.0
    %1023 = vmatpush1.msra.mxu0 0.0
    %1024 = vmatprep.subr.mxu0 0.0
    %1025 = vmatpush1.msra.mxu0 0.0
    %1026 = vmatprep.subr.mxu0 0.0
    %1027 = vmatpush1.msra.mxu0 0.0
    %1028 = vmatprep.subr.mxu0 0.0
    %1029 = vmatpush1.msra.mxu0 0.0
    %1030 = vmatprep.subr.mxu0 0.0
    %1031 = vmatpush1.msra.mxu0 0.0
    %1032 = vmatprep.subr.mxu0 0.0
    %1033 = vmatpush1.msra.mxu0 0.0
    %1034 = vmatprep.subr.mxu0 0.0
    %1035 = vmatpush1.msra.mxu0 0.0
    %1036 = vmatprep.subr.mxu0 0.0
    %1037 = vmatpush1.msra.mxu0 0.0
    %1038 = vmatprep.subr.mxu0 0.0
    %1039 = vmatpush1.msra.mxu0 0.0
    %1040 = vmatprep.subr.mxu0 0.0
    %1041 = vmatpush1.msra.mxu0 0.0
    %1042 = vmatprep.subr.mxu0 0.0
    %1043 = vmatpush1.msra.mxu0 0.0
    %1044 = vmatprep.subr.mxu0 0.0
    %1045 = vmatpush1.msra.mxu0 0.0
    %1046 = vmatprep.subr.mxu0 0.0
    %1047 = vmatpush1.msra.mxu0 0.0
    %1048 = vmatprep.subr.mxu0 0.0
    %1049 = vmatpush1.msra.mxu0 0.0
    %1050 = vmatprep.subr.mxu0 0.0
    %1051 = vmatpush1.msra.mxu0 0.0
    %1052 = vmatprep.subr.mxu0 0.0
    %1053 = vmatpush1.msra.mxu0 0.0
    %1054 = vmatprep.subr.mxu0 0.0
    %1055 = vmatpush1.msra.mxu0 0.0
    %1056 = vmatprep.subr.mxu0 0.0
    %1057 = vmatpush1.msra.mxu0 0.0
    %1058 = vmatprep.subr.mxu0 0.0
    %1059 = vmatpush1.msra.mxu0 0.0
    %1060 = vmatprep.subr.mxu0 0.0
    %1061 = vmatpush1.msra.mxu0 0.0
    %1062 = vmatprep.subr.mxu0 0.0
    %1063 = vmatpush1.msra.mxu0 0.0
    %1064 = vmatprep.mubr.f32.mxu0 0.0
    %1065 = vmatmul.mubr.f32.gmra.mrb[0].mxu0 %v998
    %v1066 = vpop.f32.mrb[0].mxu0
    %v1067 = vadd.f32 0.0, %v1066
    %v1068 = vpop.f32.mrb[0].mxu0
    %1069 = vdwg.mxu0
    %v1071 = vrot.slane %v1067, 4
    %v1073 = vadd.f32 %v332, %v1071
    %v1074 = vxor.u32 %v1073, 2147483648
    %v1075 = vmul.f32 %v1074, 1.442695
    %v1076 = vpow.pop %v1075
    %v1077 = vadd.f32 %v1076, 1.0
    %v1078 = vrcp.pop %v1077
    %v1079 = vmul.f32 1.0, %v1078
    %v1080 = vadd.f32 %v1067, %v431
    %v1082 = vrot.slane %v1080, 4
    %1083 = vrot.lane.b32.xlu0 %v1082, 64
    %v1084 = vpop.permute.xlu0 %1083
    %v1086 = vmul.f32 %v1079, %v1084
    %1088 = vrot.lane.b32.xlu0 %v1086, 64
    %v1089 = vpop.permute.xlu0 %1088
    %v1091 = vadd.f32 %v332, %v1089
    %v1092 = vtanh.pop %v1091
    %v1093 = vsub.f32 1.0, %v1079
    %1095 = vrot.lane.b32.xlu0 %v1092, 96
    %v1096 = vpop.permute.xlu0 %1095
    %v1098 = vmul.f32 %v1093, %v1096
    %v1099 = vrot.slane %v993, 6
    %v1101 = vmul.f32 %v1079, %v1099
    %v1102 = vadd.f32 %v1098, %v1101
    %v1104 = vrot.slane %v1102, 4
    %1105 = vrot.lane.b32.xlu0 %v1104, 96
    %v1106 = vpop.permute.xlu0 %1105
    %v1107 = vsel %vm147, %v1106, 0
    %1109 = vmatprep.subr.mxu0 0.0
    %1110 = vmatpush1.msra.mxu0 %v336
    %1111 = vmatprep.subr.mxu0 0.0
    %1112 = vmatpush1.msra.mxu0 %v337
    %1113 = vmatprep.subr.mxu0 0.0
    %1114 = vmatpush1.msra.mxu0 %v338
    %1115 = vmatprep.subr.mxu0 0.0
    %1116 = vmatpush1.msra.mxu0 %v339
    %1117 = vmatprep.subr.mxu0 0.0
    %1118 = vmatpush1.msra.mxu0 0.0
    %1119 = vmatprep.subr.mxu0 0.0
    %1120 = vmatpush1.msra.mxu0 0.0
    %1121 = vmatprep.subr.mxu0 0.0
    %1122 = vmatpush1.msra.mxu0 0.0
    %1123 = vmatprep.subr.mxu0 0.0
    %1124 = vmatpush1.msra.mxu0 0.0
    %1125 = vmatprep.subr.mxu0 0.0
    %1126 = vmatpush1.msra.mxu0 0.0
    %1127 = vmatprep.subr.mxu0 0.0
    %1128 = vmatpush1.msra.mxu0 0.0
    %1129 = vmatprep.subr.mxu0 0.0
    %1130 = vmatpush1.msra.mxu0 0.0
    %1131 = vmatprep.subr.mxu0 0.0
    %1132 = vmatpush1.msra.mxu0 0.0
    %1133 = vmatprep.subr.mxu0 0.0
    %1134 = vmatpush1.msra.mxu0 0.0
    %1135 = vmatprep.subr.mxu0 0.0
    %1136 = vmatpush1.msra.mxu0 0.0
    %1137 = vmatprep.subr.mxu0 0.0
    %1138 = vmatpush1.msra.mxu0 0.0
    %1139 = vmatprep.subr.mxu0 0.0
    %1140 = vmatpush1.msra.mxu0 0.0
    %1141 = vmatprep.subr.mxu0 0.0
    %1142 = vmatpush1.msra.mxu0 0.0
    %1143 = vmatprep.subr.mxu0 0.0
    %1144 = vmatpush1.msra.mxu0 0.0
    %1145 = vmatprep.subr.mxu0 0.0
    %1146 = vmatpush1.msra.mxu0 0.0
    %1147 = vmatprep.subr.mxu0 0.0
    %1148 = vmatpush1.msra.mxu0 0.0
    %1149 = vmatprep.subr.mxu0 0.0
    %1150 = vmatpush1.msra.mxu0 0.0
    %1151 = vmatprep.subr.mxu0 0.0
    %1152 = vmatpush1.msra.mxu0 0.0
    %1153 = vmatprep.subr.mxu0 0.0
    %1154 = vmatpush1.msra.mxu0 0.0
    %1155 = vmatprep.subr.mxu0 0.0
    %1156 = vmatpush1.msra.mxu0 0.0
    %1157 = vmatprep.subr.mxu0 0.0
    %1158 = vmatpush1.msra.mxu0 0.0
    %1159 = vmatprep.subr.mxu0 0.0
    %1160 = vmatpush1.msra.mxu0 0.0
    %1161 = vmatprep.subr.mxu0 0.0
    %1162 = vmatpush1.msra.mxu0 0.0
    %1163 = vmatprep.subr.mxu0 0.0
    %1164 = vmatpush1.msra.mxu0 0.0
    %1165 = vmatprep.subr.mxu0 0.0
    %1166 = vmatpush1.msra.mxu0 0.0
    %1167 = vmatprep.subr.mxu0 0.0
    %1168 = vmatpush1.msra.mxu0 0.0
    %1169 = vmatprep.subr.mxu0 0.0
    %1170 = vmatpush1.msra.mxu0 0.0
    %1171 = vmatprep.subr.mxu0 0.0
    %1172 = vmatpush1.msra.mxu0 0.0
    %1173 = vmatprep.mubr.f32.mxu0 0.0
    %1174 = vmatmul.mubr.f32.gmra.mrb[0].mxu0 %v1107
    %v1175 = vpop.f32.mrb[0].mxu0
    %v1176 = vadd.f32 0.0, %v1175
    %v1177 = vpop.f32.mrb[0].mxu0
    %1178 = vdwg.mxu0
    %v1180 = vrot.slane %v1176, 2
    %v1182 = vadd.f32 %v332, %v1180
    %v1183 = vxor.u32 %v1182, 2147483648
    %v1184 = vmul.f32 %v1183, 1.442695
    %v1185 = vpow.pop %v1184
    %v1186 = vadd.f32 %v1185, 1.0
    %v1187 = vrcp.pop %v1186
    %v1188 = vmul.f32 1.0, %v1187
    %v1189 = vadd.f32 %v1176, %v431
    %v1191 = vrot.slane %v1189, 2
    %1192 = vrot.lane.b32.xlu0 %v1191, 64
    %v1193 = vpop.permute.xlu0 %1192
    %v1195 = vmul.f32 %v1188, %v1193
    %1197 = vrot.lane.b32.xlu0 %v1195, 64
    %v1198 = vpop.permute.xlu0 %1197
    %v1200 = vadd.f32 %v332, %v1198
    %v1201 = vtanh.pop %v1200
    %v1202 = vsub.f32 1.0, %v1188
    %1204 = vrot.lane.b32.xlu0 %v1201, 96
    %v1205 = vpop.permute.xlu0 %1204
    %v1207 = vmul.f32 %v1202, %v1205
    %v1208 = vrot.slane %v1102, 6
    %v1210 = vmul.f32 %v1188, %v1208
    %v1211 = vadd.f32 %v1207, %v1210
    %vm1212 = vcmask 1041408
    %v1213 = vsel %vm1212, %v455, %v563
    %v1214 = vsel %vm54, %v1213, %v672
    %vm1215 = vcmask 1045504
    %v1216 = vsel %vm1215, %v1214, %v781
    %v1217 = vsel %vm1212, %v885, %v993
    %v1218 = vsel %vm54, %v1217, %v1102
    %v1219 = vsel %vm1215, %v1218, %v1211
    %s1220 = scalar_lea.vmem [#allocation2], 192
    %v1221 = vld [vmem:[%s1220] sm:$0xff]
    %v1222 = vld [vmem:[%s1220 + $0x8] sm:$0xff]
    %v1223 = vld [vmem:[%s1220 + $0x10] sm:$0xff]
    %v1224 = vld [vmem:[%s1220 + $0x18] sm:$0xff]
    %v1225 = vld [vmem:[%s3 + $0x4] sm:$0x1]
    %v1226 = vlaneseq
    %v1227 = vshrl.u32 %v1226, 7
    %v1228 = vsub.s32 0, %v1227
    %v1229 = vrot.slane %v1225, %v1228
    %1232 = vrot.lane.b32.xlu0 %v1216, 96
    %v1233 = vpop.permute.xlu0 %1232
    %1234 = vrot.lane.b32.xlu0 %v1219, 96
    %v1235 = vpop.permute.xlu0 %1234
    %v1236 = vsel %vm147, %v1233, 0
    %v1238 = vsel %vm147, %v1235, 0
    %1240 = vmatprep.subr.mxu0 0.0
    %1241 = vmatpush1.msra.mxu0 %v1221
    %1242 = vmatprep.subr.mxu0 0.0
    %1243 = vmatpush1.msra.mxu0 %v1222
    %1244 = vmatprep.subr.mxu0 0.0
    %1245 = vmatpush1.msra.mxu0 %v1223
    %1246 = vmatprep.subr.mxu0 0.0
    %1247 = vmatpush1.msra.mxu0 %v1224
    %1248 = vmatprep.subr.mxu0 0.0
    %1249 = vmatpush1.msra.mxu0 0.0
    %1250 = vmatprep.subr.mxu0 0.0
    %1251 = vmatpush1.msra.mxu0 0.0
    %1252 = vmatprep.subr.mxu0 0.0
    %1253 = vmatpush1.msra.mxu0 0.0
    %1254 = vmatprep.subr.mxu0 0.0
    %1255 = vmatpush1.msra.mxu0 0.0
    %1256 = vmatprep.subr.mxu0 0.0
    %1257 = vmatpush1.msra.mxu0 0.0
    %1258 = vmatprep.subr.mxu0 0.0
    %1259 = vmatpush1.msra.mxu0 0.0
    %1260 = vmatprep.subr.mxu0 0.0
    %1261 = vmatpush1.msra.mxu0 0.0
    %1262 = vmatprep.subr.mxu0 0.0
    %1263 = vmatpush1.msra.mxu0 0.0
    %1264 = vmatprep.subr.mxu0 0.0
    %1265 = vmatpush1.msra.mxu0 0.0
    %1266 = vmatprep.subr.mxu0 0.0
    %1267 = vmatpush1.msra.mxu0 0.0
    %1268 = vmatprep.subr.mxu0 0.0
    %1269 = vmatpush1.msra.mxu0 0.0
    %1270 = vmatprep.subr.mxu0 0.0
    %1271 = vmatpush1.msra.mxu0 0.0
    %1272 = vmatprep.subr.mxu0 0.0
    %1273 = vmatpush1.msra.mxu0 0.0
    %1274 = vmatprep.subr.mxu0 0.0
    %1275 = vmatpush1.msra.mxu0 0.0
    %1276 = vmatprep.subr.mxu0 0.0
    %1277 = vmatpush1.msra.mxu0 0.0
    %1278 = vmatprep.subr.mxu0 0.0
    %1279 = vmatpush1.msra.mxu0 0.0
    %1280 = vmatprep.subr.mxu0 0.0
    %1281 = vmatpush1.msra.mxu0 0.0
    %1282 = vmatprep.subr.mxu0 0.0
    %1283 = vmatpush1.msra.mxu0 0.0
    %1284 = vmatprep.subr.mxu0 0.0
    %1285 = vmatpush1.msra.mxu0 0.0
    %1286 = vmatprep.subr.mxu0 0.0
    %1287 = vmatpush1.msra.mxu0 0.0
    %1288 = vmatprep.subr.mxu0 0.0
    %1289 = vmatpush1.msra.mxu0 0.0
    %1290 = vmatprep.subr.mxu0 0.0
    %1291 = vmatpush1.msra.mxu0 0.0
    %1292 = vmatprep.subr.mxu0 0.0
    %1293 = vmatpush1.msra.mxu0 0.0
    %1294 = vmatprep.subr.mxu0 0.0
    %1295 = vmatpush1.msra.mxu0 0.0
    %1296 = vmatprep.subr.mxu0 0.0
    %1297 = vmatpush1.msra.mxu0 0.0
    %1298 = vmatprep.subr.mxu0 0.0
    %1299 = vmatpush1.msra.mxu0 0.0
    %1300 = vmatprep.subr.mxu0 0.0
    %1301 = vmatpush1.msra.mxu0 0.0
    %1302 = vmatprep.subr.mxu0 0.0
    %1303 = vmatpush1.msra.mxu0 0.0
    %1304 = vmatprep.mubr.f32.mxu0 0.0
    %1305 = vmatmul.mubr.f32.gmra.mrb[0].mxu0 %v1236
    %v1306 = vpop.f32.mrb[0].mxu0
    %v1307 = vadd.f32 %v1229, %v1306
    %v1308 = vpop.f32.mrb[0].mxu0
    %1309 = vmatprep.mubr.f32.mxu0 0.0
    %1310 = vmatmul.mubr.f32.gmra.mrb[0].mxu0 %v1238
    %v1311 = vpop.f32.mrb[0].mxu0
    %v1312 = vadd.f32 %v1229, %v1311
    %v1313 = vpop.f32.mrb[0].mxu0
    %1314 = vdwg.mxu0
    %v1315 = vtanh.pop %v1307
    %v1316 = vtanh.pop %v1312
    %s1317 = scalar_lea.vmem [#allocation2], 240
    %v1318 = vld [vmem:[%s1317] sm:$0xff]
    %v1319 = vld [vmem:[%s1317 + $0x8] sm:$0xff]
    %v1320 = vld [vmem:[%s1317 + $0x10] sm:$0xff]
    %v1321 = vld [vmem:[%s1317 + $0x18] sm:$0xff]
    %v1322 = vld [vmem:[%s1317 + $0x20] sm:$0xff]
    %v1323 = vld [vmem:[%s1317 + $0x28] sm:$0xff]
    %v1324 = vld [vmem:[%s3 + $0x5] sm:$0x1]
    %v1325 = vlaneseq
    %v1326 = vshrl.u32 %v1325, 7
    %v1327 = vsub.s32 0, %v1326
    %v1328 = vrot.slane %v1324, %v1327
    %vm1329 = vcmask 392192
    %v1331 = vsel %vm1329, %v1315, 0
    %v1334 = vsel %vm1329, %v1316, 0
    %1336 = vmatprep.subr.mxu0 0.0
    %1337 = vmatpush1.msra.mxu0 %v1318
    %1338 = vmatprep.subr.mxu0 0.0
    %1339 = vmatpush1.msra.mxu0 %v1319
    %1340 = vmatprep.subr.mxu0 0.0
    %1341 = vmatpush1.msra.mxu0 %v1320
    %1342 = vmatprep.subr.mxu0 0.0
    %1343 = vmatpush1.msra.mxu0 %v1321
    %1344 = vmatprep.subr.mxu0 0.0
    %1345 = vmatpush1.msra.mxu0 %v1322
    %1346 = vmatprep.subr.mxu0 0.0
    %1347 = vmatpush1.msra.mxu0 %v1323
    %1348 = vmatprep.subr.mxu0 0.0
    %1349 = vmatpush1.msra.mxu0 0.0
    %1350 = vmatprep.subr.mxu0 0.0
    %1351 = vmatpush1.msra.mxu0 0.0
    %1352 = vmatprep.subr.mxu0 0.0
    %1353 = vmatpush1.msra.mxu0 0.0
    %1354 = vmatprep.subr.mxu0 0.0
    %1355 = vmatpush1.msra.mxu0 0.0
    %1356 = vmatprep.subr.mxu0 0.0
    %1357 = vmatpush1.msra.mxu0 0.0
    %1358 = vmatprep.subr.mxu0 0.0
    %1359 = vmatpush1.msra.mxu0 0.0
    %1360 = vmatprep.subr.mxu0 0.0
    %1361 = vmatpush1.msra.mxu0 0.0
    %1362 = vmatprep.subr.mxu0 0.0
    %1363 = vmatpush1.msra.mxu0 0.0
    %1364 = vmatprep.subr.mxu0 0.0
    %1365 = vmatpush1.msra.mxu0 0.0
    %1366 = vmatprep.subr.mxu0 0.0
    %1367 = vmatpush1.msra.mxu0 0.0
    %1368 = vmatprep.subr.mxu0 0.0
    %1369 = vmatpush1.msra.mxu0 0.0
    %1370 = vmatprep.subr.mxu0 0.0
    %1371 = vmatpush1.msra.mxu0 0.0
    %1372 = vmatprep.subr.mxu0 0.0
    %1373 = vmatpush1.msra.mxu0 0.0
    %1374 = vmatprep.subr.mxu0 0.0
    %1375 = vmatpush1.msra.mxu0 0.0
    %1376 = vmatprep.subr.mxu0 0.0
    %1377 = vmatpush1.msra.mxu0 0.0
    %1378 = vmatprep.subr.mxu0 0.0
    %1379 = vmatpush1.msra.mxu0 0.0
    %1380 = vmatprep.subr.mxu0 0.0
    %1381 = vmatpush1.msra.mxu0 0.0
    %1382 = vmatprep.subr.mxu0 0.0
    %1383 = vmatpush1.msra.mxu0 0.0
    %1384 = vmatprep.subr.mxu0 0.0
    %1385 = vmatpush1.msra.mxu0 0.0
    %1386 = vmatprep.subr.mxu0 0.0
    %1387 = vmatpush1.msra.mxu0 0.0
    %1388 = vmatprep.subr.mxu0 0.0
    %1389 = vmatpush1.msra.mxu0 0.0
    %1390 = vmatprep.subr.mxu0 0.0
    %1391 = vmatpush1.msra.mxu0 0.0
    %1392 = vmatprep.subr.mxu0 0.0
    %1393 = vmatpush1.msra.mxu0 0.0
    %1394 = vmatprep.subr.mxu0 0.0
    %1395 = vmatpush1.msra.mxu0 0.0
    %1396 = vmatprep.subr.mxu0 0.0
    %1397 = vmatpush1.msra.mxu0 0.0
    %1398 = vmatprep.subr.mxu0 0.0
    %1399 = vmatpush1.msra.mxu0 0.0
    %1400 = vmatprep.mubr.f32.mxu0 0.0
    %1401 = vmatmul.mubr.f32.gmra.mrb[0].mxu0 %v1331
    %v1402 = vpop.f32.mrb[0].mxu0
    %v1403 = vadd.f32 %v1328, %v1402
    %v1404 = vpop.f32.mrb[0].mxu0
    %1405 = vmatprep.mubr.f32.mxu0 0.0
    %1406 = vmatmul.mubr.f32.gmra.mrb[0].mxu0 %v1334
    %v1407 = vpop.f32.mrb[0].mxu0
    %v1408 = vadd.f32 %v1328, %v1407
    %v1409 = vpop.f32.mrb[0].mxu0
    %1410 = vdwg.mxu0
    %v1411 = vtanh.pop %v1403
    %v1412 = vtanh.pop %v1408
    %s1413 = scalar_lea.vmem [#allocation2], 288
    %v1414 = vld [vmem:[%s1413] sm:$0xff]
    %v1415 = vld [vmem:[%s1413 + $0x8] sm:$0xff]
    %v1416 = vld [vmem:[%s1413 + $0x10] sm:$0xff]
    %v1417 = vld [vmem:[%s1413 + $0x18] sm:$0xff]
    %v1418 = vld [vmem:[%s3 + $0x6] sm:$0x1]
    %v1419 = vlaneseq
    %v1420 = vshrl.u32 %v1419, 7
    %v1421 = vsub.s32 0, %v1420
    %v1422 = vrot.slane %v1418, %v1421
    %v1424 = vsel %vm147, %v1411, 0
    %v1427 = vsel %vm147, %v1412, 0
    %1429 = vmatprep.subr.mxu0 0.0
    %1430 = vmatpush1.msra.mxu0 %v1414
    %1431 = vmatprep.subr.mxu0 0.0
    %1432 = vmatpush1.msra.mxu0 %v1415
    %1433 = vmatprep.subr.mxu0 0.0
    %1434 = vmatpush1.msra.mxu0 %v1416
    %1435 = vmatprep.subr.mxu0 0.0
    %1436 = vmatpush1.msra.mxu0 %v1417
    %1437 = vmatprep.subr.mxu0 0.0
    %1438 = vmatpush1.msra.mxu0 0.0
    %1439 = vmatprep.subr.mxu0 0.0
    %1440 = vmatpush1.msra.mxu0 0.0
    %1441 = vmatprep.subr.mxu0 0.0
    %1442 = vmatpush1.msra.mxu0 0.0
    %1443 = vmatprep.subr.mxu0 0.0
    %1444 = vmatpush1.msra.mxu0 0.0
    %1445 = vmatprep.subr.mxu0 0.0
    %1446 = vmatpush1.msra.mxu0 0.0
    %1447 = vmatprep.subr.mxu0 0.0
    %1448 = vmatpush1.msra.mxu0 0.0
    %1449 = vmatprep.subr.mxu0 0.0
    %1450 = vmatpush1.msra.mxu0 0.0
    %1451 = vmatprep.subr.mxu0 0.0
    %1452 = vmatpush1.msra.mxu0 0.0
    %1453 = vmatprep.subr.mxu0 0.0
    %1454 = vmatpush1.msra.mxu0 0.0
    %1455 = vmatprep.subr.mxu0 0.0
    %1456 = vmatpush1.msra.mxu0 0.0
    %1457 = vmatprep.subr.mxu0 0.0
    %1458 = vmatpush1.msra.mxu0 0.0
    %1459 = vmatprep.subr.mxu0 0.0
    %1460 = vmatpush1.msra.mxu0 0.0
    %1461 = vmatprep.subr.mxu0 0.0
    %1462 = vmatpush1.msra.mxu0 0.0
    %1463 = vmatprep.subr.mxu0 0.0
    %1464 = vmatpush1.msra.mxu0 0.0
    %1465 = vmatprep.subr.mxu0 0.0
    %1466 = vmatpush1.msra.mxu0 0.0
    %1467 = vmatprep.subr.mxu0 0.0
    %1468 = vmatpush1.msra.mxu0 0.0
    %1469 = vmatprep.subr.mxu0 0.0
    %1470 = vmatpush1.msra.mxu0 0.0
    %1471 = vmatprep.subr.mxu0 0.0
    %1472 = vmatpush1.msra.mxu0 0.0
    %1473 = vmatprep.subr.mxu0 0.0
    %1474 = vmatpush1.msra.mxu0 0.0
    %1475 = vmatprep.subr.mxu0 0.0
    %1476 = vmatpush1.msra.mxu0 0.0
    %1477 = vmatprep.subr.mxu0 0.0
    %1478 = vmatpush1.msra.mxu0 0.0
    %1479 = vmatprep.subr.mxu0 0.0
    %1480 = vmatpush1.msra.mxu0 0.0
    %1481 = vmatprep.subr.mxu0 0.0
    %1482 = vmatpush1.msra.mxu0 0.0
    %1483 = vmatprep.subr.mxu0 0.0
    %1484 = vmatpush1.msra.mxu0 0.0
    %1485 = vmatprep.subr.mxu0 0.0
    %1486 = vmatpush1.msra.mxu0 0.0
    %1487 = vmatprep.subr.mxu0 0.0
    %1488 = vmatpush1.msra.mxu0 0.0
    %1489 = vmatprep.subr.mxu0 0.0
    %1490 = vmatpush1.msra.mxu0 0.0
    %1491 = vmatprep.subr.mxu0 0.0
    %1492 = vmatpush1.msra.mxu0 0.0
    %1493 = vmatprep.mubr.f32.mxu0 0.0
    %1494 = vmatmul.mubr.f32.gmra.mrb[0].mxu0 %v1424
    %v1495 = vpop.f32.mrb[0].mxu0
    %v1496 = vadd.f32 %v1422, %v1495
    %v1497 = vpop.f32.mrb[0].mxu0
    %1498 = vmatprep.mubr.f32.mxu0 0.0
    %1499 = vmatmul.mubr.f32.gmra.mrb[0].mxu0 %v1427
    %v1500 = vpop.f32.mrb[0].mxu0
    %v1501 = vadd.f32 %v1422, %v1500
    %v1502 = vpop.f32.mrb[0].mxu0
    %1503 = vdwg.mxu0
    %v1504 = vtanh.pop %v1496
    %v1505 = vtanh.pop %v1501
    %vm1506 = vcmask 269312
    %1507 = vst.msk [vmem:[%s4] sm:$0xff] %vm1506, %v1504
    %1508 = vst.msk [vmem:[%s4 + $0x8] sm:$0xff] %vm1506, %v1505
    // Predicated region
    $region22: #{conditional_rnn_process.1} parent=1 // pred_check
      _
    $region23: #{conditional_rnn_process.1} parent=1 // pred_check_branch
      %1510 = sbr.rel (0) target = $region25
    $region24: #{conditional_rnn_process.1} parent=1 // pred_region
      _
    $region25: #{conditional_rnn_process.1} parent=1 // pred_fallthru
      _
    // Predicated region
    $region26: #{conditional_rnn_process.1} parent=1 // pred_check
      _
    $region27: #{conditional_rnn_process.1} parent=1 // pred_check_branch
      %1512 = sbr.rel (0) target = $region29
    $region28: #{conditional_rnn_process.1} parent=1 // pred_region
      _
    $region29: #{conditional_rnn_process.1} parent=1 // pred_fallthru
      _
    %1513 = vsyncpa [#allocation3], 1

</llo_original>
